<compile_context>
chip_gen: v5e
topology: v5e:2x2
jax: 0.10.0
libtpu: 0.0.40
codegen_flags: <defaults>
</compile_context>

<pallas_src>
import functools

import jax
import jax.numpy as jnp
from jax.experimental import pallas as pl
from jax.experimental.pallas import tpu as pltpu


# ----------------------------------------------------------------------------
# Fused PConv kernel (one image per grid step)
# ----------------------------------------------------------------------------
def _pconv_fused_kernel(x_ref, wbig_t_ref, wcat_t_ref, sb_ref, o_ref,
                        xp_ref, lhs1_ref, y_ref, lhs2_ref, *,
                        k, s, h, w, wp, c1, c2, m1, m2, hout, wout,
                        branch_offs, crop_in_kernel):
    # x_ref:      (1, c1, h*w)     raw NCHW image, spatial flattened
    # wbig_t_ref: (c2, 4*k*c1)     transposed block-diagonal branch weights
    # wcat_t_ref: (c2, 4*c2)       transposed 2x2 cat-conv weights (tap-major K)
    # sb_ref:     (c2, 4)          cols: branch scale, branch bias, cat scale, cat bias
    # o_ref:      (1, c2, hout*wout) cropped NCHW output   (s == 1)
    #             (1, c2, m2)        dense flat candidates (s  > 1)
    # scratch:    xp (c1, lx) | lhs1 (4*k*c1, m1) | y (c2, m1) | lhs2 (4*c2, m2)
    f32 = jnp.float32

    # Folded eval-mode BN params: one channel per sublane -> broadcast along
    # the lane (spatial) dimension.  Hoisted once (straight-line kernel).
    s_br, b_br = sb_ref[:, 0:1], sb_ref[:, 1:2]
    s_cat, b_cat = sb_ref[:, 2:3], sb_ref[:, 3:4]

    # ---- union zero-padding done in VMEM (input read from HBM exactly once) -
    xp_ref[...] = jnp.zeros_like(xp_ref)
    for r in range(h):                              # lane-dense row copies
        base = (k + r) * wp + k
        xp_ref[:, base:base + w] = x_ref[0, :, r * w:(r + 1) * w]

    # ---- Phase 1: all four asymmetric-pad branch convs as ONE matmul --------
    # Each (branch, tap) im2col slab is a contiguous lane-slice of the padded
    # flattened input; stack along K (rows) -> full-lane row writes.
    for idx, off in enumerate(branch_offs):
        lhs1_ref[idx * c1:(idx + 1) * c1, :] = xp_ref[:, off:off + m1]
    y = jnp.dot(wbig_t_ref[...], lhs1_ref[...],
                preferred_element_type=f32)         # (c2, m1), concat channel order
    y = y * s_br + b_br                             # folded BN (eval mode)
    y_ref[...] = y * jax.nn.sigmoid(y)              # SiLU

    # ---- Phase 2: fused 2x2 "cat" conv, consumed straight from VMEM ---------
    for idx, (di, dj) in enumerate(((0, 0), (0, 1), (1, 0), (1, 1))):
        dq = s * (di * wp + dj)
        lhs2_ref[idx * c2:(idx + 1) * c2, :] = y_ref[:, dq:dq + m2]
    out = jnp.dot(wcat_t_ref[...], lhs2_ref[...],
                  preferred_element_type=f32)       # (c2, m2)
    out = out * s_cat + b_cat
    out = (out * jax.nn.sigmoid(out)).astype(o_ref.dtype)

    if crop_in_kernel:
        # s == 1: drop the junk (padding) columns while storing; each store is
        # c2 sublanes x wout lanes and the output is already cropped NCHW.
        for i in range(hout):
            o_ref[0, :, i * wout:(i + 1) * wout] = out[:, i * wp:i * wp + wout]
    else:
        # TODO(synk): s > 1 keeps the dense stride-1 candidates and crops with
        # a strided slice in the wrapper; a strided in-kernel tap layout would
        # remove the ~s^2 overcompute.
        o_ref[0] = out


# ----------------------------------------------------------------------------
# PConv forward (NCHW in / NCHW out, matching the PyTorch module)
# ----------------------------------------------------------------------------
@functools.partial(jax.jit, static_argnames=("k", "s"))
def pconv_forward(x_nchw, params, k, s):
    n, c1, h, w = x_nchw.shape
    c2 = params["w_cat"].shape[-1]
    c4 = c2 // 4
    hp, wp = h + 2 * k, w + 2 * k
    hout, wout = h // s, w // s                     # final output spatial
    lx = (hp + 2) * wp                              # padded flattened length (+ tail)
    m1 = (s * hout + 2) * wp                        # phase-1 candidate positions
    m2 = (s * (hout - 1) + 1) * wp                  # phase-2 candidate positions

    # Per-(branch, tap) lane offsets into the flattened union-padded image.
    # Branch top-lefts inside the union pad, from the module's
    # ZeroPad2d(left, right, top, bottom) list:
    #   b0 = cw (L=k,T=1) -> (k-1, 0);  b1 = cw (R=k,B=1) -> (k, k)
    #   b2 = ch (T=k,R=1) -> (0, k);    b3 = ch (B=k,L=1) -> (k, k-1)
    tl = [(k - 1, 0), (k, k), (0, k), (k, k - 1)]
    branch_offs = []
    for b, (r0, c0) in enumerate(tl):
        horizontal = b < 2                          # cw: taps along width
        for t in range(k):
            di, dj = (0, t) if horizontal else (t, 0)
            branch_offs.append((r0 + di) * wp + (c0 + dj))
    branch_offs = tuple(branch_offs)
    assert max(branch_offs) + m1 <= lx              # slab reads stay in bounds
    assert s * (wp + 1) + m2 <= m1                  # phase-2 taps stay in bounds

    # Transposed block-diagonal branch weight (c2, 4*k*c1): branch b's taps
    # feed output channels [b*c4, (b+1)*c4) -> y is already the concatenated
    # [yw0|yw1|yh0|yh1] block.
    def branch_block(wk, b):
        wt = wk.reshape(k * c1, c4)                 # HWIO -> (tap*cin, cout)
        return jnp.pad(wt, ((0, 0), (b * c4, c2 - (b + 1) * c4)))

    wbig_t = jnp.concatenate(
        [branch_block(params["w_cw"], 0), branch_block(params["w_cw"], 1),
         branch_block(params["w_ch"], 2), branch_block(params["w_ch"], 3)],
        axis=0).T                                   # (c2, 4*k*c1)
    wcat_t = params["w_cat"].reshape(4 * c2, c2).T  # (c2, 4*c2), tap-major K

    s_br = jnp.concatenate([params["s_cw"][0], params["s_cw"][0],
                            params["s_ch"][0], params["s_ch"][0]])
    b_br = jnp.concatenate([params["b_cw"][0], params["b_cw"][0],
                            params["b_ch"][0], params["b_ch"][0]])
    sb = jnp.stack([s_br, b_br, params["s_cat"][0], params["b_cat"][0]],
                   axis=1)                          # (c2, 4)

    x_flat = x_nchw.reshape(n, c1, h * w)           # layout-preserving merge

    crop_in_kernel = (s == 1)
    out_len = hout * wout if crop_in_kernel else m2

    kernel = functools.partial(
        _pconv_fused_kernel, k=k, s=s, h=h, w=w, wp=wp, c1=c1, c2=c2,
        m1=m1, m2=m2, hout=hout, wout=wout, branch_offs=branch_offs,
        crop_in_kernel=crop_in_kernel)

    flops = 2 * n * (m1 * (4 * k * c1) * c2 + m2 * (4 * c2) * c2)
    transcendentals = n * c2 * (m1 + m2)
    bytes_accessed = 4 * (n * c1 * h * w + n * c2 * out_len
                          + c2 * 4 * k * c1 + c2 * 4 * c2 + c2 * 4)
    scratch_bytes = 4 * (c1 * lx + 4 * k * c1 * m1 + c2 * m1 + 4 * c2 * m2)
    block_bytes = 4 * (c1 * h * w + c2 * out_len)
    vmem_limit = int(min(100 * 1024 * 1024,
                         max(8 * 1024 * 1024,
                             2 * (scratch_bytes + 2 * block_bytes))))

    # TODO(synk): for large H*W add an output-row-tile grid axis (halo via
    # manual make_async_copy) so v7x's 64 MiB VMEM holds and each TensorCore
    # gets several pipelined steps; at these shapes one image per step is a
    # few hundred KB of VMEM.
    out_flat = pl.pallas_call(
        kernel,
        out_shape=jax.ShapeDtypeStruct((n, c2, out_len), x_nchw.dtype),
        grid=(n,),
        in_specs=[
            pl.BlockSpec((1, c1, h * w), lambda b: (b, 0, 0)),
            pl.BlockSpec((c2, 4 * k * c1), lambda b: (0, 0)),
            pl.BlockSpec((c2, 4 * c2), lambda b: (0, 0)),
            pl.BlockSpec((c2, 4), lambda b: (0, 0)),
        ],
        out_specs=pl.BlockSpec((1, c2, out_len), lambda b: (b, 0, 0)),
        scratch_shapes=[
            pltpu.VMEM((c1, lx), jnp.float32),
            pltpu.VMEM((4 * k * c1, m1), jnp.float32),
            pltpu.VMEM((c2, m1), jnp.float32),
            pltpu.VMEM((4 * c2, m2), jnp.float32),
        ],
        compiler_params=pltpu.CompilerParams(
            dimension_semantics=("parallel",),      # batch across TCs (v7x)
            vmem_limit_bytes=vmem_limit,
        ),
        cost_estimate=pl.CostEstimate(flops=flops,
                                      transcendentals=transcendentals,
                                      bytes_accessed=bytes_accessed),
    )(x_flat, wbig_t, wcat_t, sb)

    if crop_in_kernel:
        return out_flat.reshape(n, c2, hout, wout)  # layout-preserving split
    # s > 1 fallback: dense stride-1 candidates -> strided crop in the wrapper.
    rows = s * (hout - 1) + 1
    out = out_flat.reshape(n, c2, rows, wp)
    return out[:, :, ::s, :(wout - 1) * s + 1:s]


# ----------------------------------------------------------------------------
# Pure-JAX reference (for correctness check)
# ----------------------------------------------------------------------------
def _ref_conv_bn_silu(xp_img, w, scale, bias, stride):
    y = jax.lax.conv_general_dilated(
        xp_img, w, window_strides=(stride, stride), padding="VALID",
        dimension_numbers=("NHWC", "HWIO", "NHWC"),
        precision=jax.lax.Precision.HIGHEST,
    )
    y = y * scale[0] + bias[0]
    return y * jax.nn.sigmoid(y)


def ref_pconv_forward(x_nchw, params, k, s):
    x = jnp.transpose(x_nchw, (0, 2, 3, 1))
    # ((top, bottom), (left, right)) per branch, matching ZeroPad2d(l, r, t, b)
    pads = [((1, 0), (k, 0)), ((0, 1), (0, k)), ((k, 0), (0, 1)), ((0, k), (1, 0))]

    def pad(y, p):
        (pt, pb), (pleft, pright) = p
        return jnp.pad(y, ((0, 0), (pt, pb), (pleft, pright), (0, 0)))

    yw0 = _ref_conv_bn_silu(pad(x, pads[0]), params["w_cw"], params["s_cw"], params["b_cw"], s)
    yw1 = _ref_conv_bn_silu(pad(x, pads[1]), params["w_cw"], params["s_cw"], params["b_cw"], s)
    yh0 = _ref_conv_bn_silu(pad(x, pads[2]), params["w_ch"], params["s_ch"], params["b_ch"], s)
    yh1 = _ref_conv_bn_silu(pad(x, pads[3]), params["w_ch"], params["s_ch"], params["b_ch"], s)
    y = jnp.concatenate([yw0, yw1, yh0, yh1], axis=-1)
    out = _ref_conv_bn_silu(y, params["w_cat"], params["s_cat"], params["b_cat"], 1)
    return jnp.transpose(out, (0, 3, 1, 2))


# ----------------------------------------------------------------------------
# Deterministic parameter construction (synthetic, folded eval-mode BN)
# ----------------------------------------------------------------------------
def make_params(key, c1, c2, k):
    def folded_bn(key, cout):
        k1, k2, k3, k4 = jax.random.split(key, 4)
        gamma = jax.random.uniform(k1, (cout,), jnp.float32, 0.5, 1.5)
        beta = 0.1 * jax.random.normal(k2, (cout,), jnp.float32)
        mean = 0.1 * jax.random.normal(k3, (cout,), jnp.float32)
        var = jax.random.uniform(k4, (cout,), jnp.float32, 0.5, 1.5)
        eps = 1e-5
        scale = gamma / jnp.sqrt(var + eps)
        bias = beta - mean * scale
        return scale.reshape(1, cout), bias.reshape(1, cout)

    kcw, kch, kcat, bcw, bch, bcat = jax.random.split(key, 6)
    c4 = c2 // 4
    params = {
        # HWIO weights (PyTorch OIHW -> HWIO)
        "w_cw": 0.2 * jax.random.normal(kcw, (1, k, c1, c4), jnp.float32),    # (1,k) conv
        "w_ch": 0.2 * jax.random.normal(kch, (k, 1, c1, c4), jnp.float32),    # (k,1) conv
        "w_cat": 0.2 * jax.random.normal(kcat, (2, 2, c2, c2), jnp.float32),  # 2x2 conv
    }
    params["s_cw"], params["b_cw"] = folded_bn(bcw, c4)
    params["s_ch"], params["b_ch"] = folded_bn(bch, c4)
    params["s_cat"], params["b_cat"] = folded_bn(bcat, c2)
    return params


if __name__ == "__main__":
    key = jax.random.PRNGKey(0)
    k_x, k_p = jax.random.split(key)

    N, c1, H, W = 2, 4, 16, 16
    c2, k = 8, 3

    x = jax.random.normal(k_x, (N, c1, H, W), jnp.float32)  # NCHW, like PyTorch
    params = make_params(k_p, c1, c2, k)

    for s in (1, 2):
        out = jax.block_until_ready(pconv_forward(x, params, k, s))
        ref = jax.block_until_ready(ref_pconv_forward(x, params, k, s))
        assert out.shape == (N, c2, H // s, W // s), (s, out.shape)
        max_err = float(jnp.max(jnp.abs(out - ref)))
        if max_err > 2e-3:
            raise AssertionError(f"s={s}: mismatch vs reference, max abs err = {max_err}")

    print("KERNEL_OK")
</pallas_src>

<mosaic_0001>
module attributes {stable_mosaic.version = 11 : i64} {
  func.func @_pconv_fused_kernel(%arg0: i32, %arg1: memref<1x4x256xf32, #tpu.memory_space<vmem>>, %arg2: memref<8x48xf32, #tpu.memory_space<vmem>>, %arg3: memref<8x32xf32, #tpu.memory_space<vmem>>, %arg4: memref<8x4xf32, #tpu.memory_space<vmem>>, %arg5: memref<1x8x256xf32, #tpu.memory_space<vmem>>, %arg6: memref<4x528xf32, #tpu.memory_space<vmem>>, %arg7: memref<48x396xf32, #tpu.memory_space<vmem>>, %arg8: memref<8x396xf32, #tpu.memory_space<vmem>>, %arg9: memref<32x352xf32, #tpu.memory_space<vmem>>) attributes {dimension_semantics = [#tpu.dimension_semantics<parallel>], iteration_bounds = array<i64: 2>, scalar_prefetch = 0 : i64, scratch_operands = 4 : i64, tpu.core_type = #tpu.core_type<tc>, window_params = [{transform_indices = @transform_0, window_bounds = array<i64: 1, 4, 256>}, {pipeline_mode = #tpu.pipeline_mode<synchronous>, transform_indices = @transform_1, window_bounds = array<i64: 8, 48>}, {pipeline_mode = #tpu.pipeline_mode<synchronous>, transform_indices = @transform_2, window_bounds = array<i64: 8, 32>}, {pipeline_mode = #tpu.pipeline_mode<synchronous>, transform_indices = @transform_3, window_bounds = array<i64: 8, 4>}, {transform_indices = @transform_4, window_bounds = array<i64: 1, 8, 256>}]} {
    %c0 = arith.constant 0 : index
    %c0_0 = arith.constant 0 : index
    %0 = vector.load %arg4[%c0, %c0_0] : memref<8x4xf32, #tpu.memory_space<vmem>>, vector<8x1xf32>
    %c0_1 = arith.constant 0 : index
    %c1 = arith.constant 1 : index
    %1 = vector.load %arg4[%c0_1, %c1] : memref<8x4xf32, #tpu.memory_space<vmem>>, vector<8x1xf32>
    %c0_2 = arith.constant 0 : index
    %c2 = arith.constant 2 : index
    %2 = vector.load %arg4[%c0_2, %c2] : memref<8x4xf32, #tpu.memory_space<vmem>>, vector<8x1xf32>
    %c0_3 = arith.constant 0 : index
    %c3 = arith.constant 3 : index
    %3 = vector.load %arg4[%c0_3, %c3] : memref<8x4xf32, #tpu.memory_space<vmem>>, vector<8x1xf32>
    %cst = arith.constant 0.000000e+00 : f32
    %4 = vector.broadcast %cst : f32 to vector<4x528xf32>
    %c0_4 = arith.constant 0 : index
    %c0_5 = arith.constant 0 : index
    %5 = vector.load %arg6[%c0_4, %c0_5] : memref<4x528xf32, #tpu.memory_space<vmem>>, vector<4x528xf32>
    tpu.vector_store %arg6[%c0_4, %c0_5], %4 {strides = array<i32>} : memref<4x528xf32, #tpu.memory_space<vmem>>, vector<4x528xf32>,
    %c0_6 = arith.constant 0 : index
    %c0_7 = arith.constant 0 : index
    %c0_8 = arith.constant 0 : index
    %6 = vector.load %arg1[%c0_6, %c0_7, %c0_8] : memref<1x4x256xf32, #tpu.memory_space<vmem>>, vector<1x4x16xf32>
    %7 = vector.shape_cast %6 : vector<1x4x16xf32> to vector<4x16xf32>
    %c0_9 = arith.constant 0 : index
    %c69 = arith.constant 69 : index
    %8 = vector.load %arg6[%c0_9, %c69] : memref<4x528xf32, #tpu.memory_space<vmem>>, vector<4x16xf32>
    tpu.vector_store %arg6[%c0_9, %c69], %7 {strides = array<i32>} : memref<4x528xf32, #tpu.memory_space<vmem>>, vector<4x16xf32>,
    %c0_10 = arith.constant 0 : index
    %c0_11 = arith.constant 0 : index
    %c16 = arith.constant 16 : index
    %9 = vector.load %arg1[%c0_10, %c0_11, %c16] : memref<1x4x256xf32, #tpu.memory_space<vmem>>, vector<1x4x16xf32>
    %10 = vector.shape_cast %9 : vector<1x4x16xf32> to vector<4x16xf32>
    %c0_12 = arith.constant 0 : index
    %c91 = arith.constant 91 : index
    %11 = vector.load %arg6[%c0_12, %c91] : memref<4x528xf32, #tpu.memory_space<vmem>>, vector<4x16xf32>
    tpu.vector_store %arg6[%c0_12, %c91], %10 {strides = array<i32>} : memref<4x528xf32, #tpu.memory_space<vmem>>, vector<4x16xf32>,
    %c0_13 = arith.constant 0 : index
    %c0_14 = arith.constant 0 : index
    %c32 = arith.constant 32 : index
    %12 = vector.load %arg1[%c0_13, %c0_14, %c32] : memref<1x4x256xf32, #tpu.memory_space<vmem>>, vector<1x4x16xf32>
    %13 = vector.shape_cast %12 : vector<1x4x16xf32> to vector<4x16xf32>
    %c0_15 = arith.constant 0 : index
    %c113 = arith.constant 113 : index
    %14 = vector.load %arg6[%c0_15, %c113] : memref<4x528xf32, #tpu.memory_space<vmem>>, vector<4x16xf32>
    tpu.vector_store %arg6[%c0_15, %c113], %13 {strides = array<i32>} : memref<4x528xf32, #tpu.memory_space<vmem>>, vector<4x16xf32>,
    %c0_16 = arith.constant 0 : index
    %c0_17 = arith.constant 0 : index
    %c48 = arith.constant 48 : index
    %15 = vector.load %arg1[%c0_16, %c0_17, %c48] : memref<1x4x256xf32, #tpu.memory_space<vmem>>, vector<1x4x16xf32>
    %16 = vector.shape_cast %15 : vector<1x4x16xf32> to vector<4x16xf32>
    %c0_18 = arith.constant 0 : index
    %c135 = arith.constant 135 : index
    %17 = vector.load %arg6[%c0_18, %c135] : memref<4x528xf32, #tpu.memory_space<vmem>>, vector<4x16xf32>
    tpu.vector_store %arg6[%c0_18, %c135], %16 {strides = array<i32>} : memref<4x528xf32, #tpu.memory_space<vmem>>, vector<4x16xf32>,
    %c0_19 = arith.constant 0 : index
    %c0_20 = arith.constant 0 : index
    %c64 = arith.constant 64 : index
    %18 = vector.load %arg1[%c0_19, %c0_20, %c64] : memref<1x4x256xf32, #tpu.memory_space<vmem>>, vector<1x4x16xf32>
    %19 = vector.shape_cast %18 : vector<1x4x16xf32> to vector<4x16xf32>
    %c0_21 = arith.constant 0 : index
    %c157 = arith.constant 157 : index
    %20 = vector.load %arg6[%c0_21, %c157] : memref<4x528xf32, #tpu.memory_space<vmem>>, vector<4x16xf32>
    tpu.vector_store %arg6[%c0_21, %c157], %19 {strides = array<i32>} : memref<4x528xf32, #tpu.memory_space<vmem>>, vector<4x16xf32>,
    %c0_22 = arith.constant 0 : index
    %c0_23 = arith.constant 0 : index
    %c80 = arith.constant 80 : index
    %21 = vector.load %arg1[%c0_22, %c0_23, %c80] : memref<1x4x256xf32, #tpu.memory_space<vmem>>, vector<1x4x16xf32>
    %22 = vector.shape_cast %21 : vector<1x4x16xf32> to vector<4x16xf32>
    %c0_24 = arith.constant 0 : index
    %c179 = arith.constant 179 : index
    %23 = vector.load %arg6[%c0_24, %c179] : memref<4x528xf32, #tpu.memory_space<vmem>>, vector<4x16xf32>
    tpu.vector_store %arg6[%c0_24, %c179], %22 {strides = array<i32>} : memref<4x528xf32, #tpu.memory_space<vmem>>, vector<4x16xf32>,
    %c0_25 = arith.constant 0 : index
    %c0_26 = arith.constant 0 : index
    %c96 = arith.constant 96 : index
    %24 = vector.load %arg1[%c0_25, %c0_26, %c96] : memref<1x4x256xf32, #tpu.memory_space<vmem>>, vector<1x4x16xf32>
    %25 = vector.shape_cast %24 : vector<1x4x16xf32> to vector<4x16xf32>
    %c0_27 = arith.constant 0 : index
    %c201 = arith.constant 201 : index
    %26 = vector.load %arg6[%c0_27, %c201] : memref<4x528xf32, #tpu.memory_space<vmem>>, vector<4x16xf32>
    tpu.vector_store %arg6[%c0_27, %c201], %25 {strides = array<i32>} : memref<4x528xf32, #tpu.memory_space<vmem>>, vector<4x16xf32>,
    %c0_28 = arith.constant 0 : index
    %c0_29 = arith.constant 0 : index
    %c112 = arith.constant 112 : index
    %27 = vector.load %arg1[%c0_28, %c0_29, %c112] : memref<1x4x256xf32, #tpu.memory_space<vmem>>, vector<1x4x16xf32>
    %28 = vector.shape_cast %27 : vector<1x4x16xf32> to vector<4x16xf32>
    %c0_30 = arith.constant 0 : index
    %c223 = arith.constant 223 : index
    %29 = vector.load %arg6[%c0_30, %c223] : memref<4x528xf32, #tpu.memory_space<vmem>>, vector<4x16xf32>
    tpu.vector_store %arg6[%c0_30, %c223], %28 {strides = array<i32>} : memref<4x528xf32, #tpu.memory_space<vmem>>, vector<4x16xf32>,
    %c0_31 = arith.constant 0 : index
    %c0_32 = arith.constant 0 : index
    %c128 = arith.constant 128 : index
    %30 = vector.load %arg1[%c0_31, %c0_32, %c128] : memref<1x4x256xf32, #tpu.memory_space<vmem>>, vector<1x4x16xf32>
    %31 = vector.shape_cast %30 : vector<1x4x16xf32> to vector<4x16xf32>
    %c0_33 = arith.constant 0 : index
    %c245 = arith.constant 245 : index
    %32 = vector.load %arg6[%c0_33, %c245] : memref<4x528xf32, #tpu.memory_space<vmem>>, vector<4x16xf32>
    tpu.vector_store %arg6[%c0_33, %c245], %31 {strides = array<i32>} : memref<4x528xf32, #tpu.memory_space<vmem>>, vector<4x16xf32>,
    %c0_34 = arith.constant 0 : index
    %c0_35 = arith.constant 0 : index
    %c144 = arith.constant 144 : index
    %33 = vector.load %arg1[%c0_34, %c0_35, %c144] : memref<1x4x256xf32, #tpu.memory_space<vmem>>, vector<1x4x16xf32>
    %34 = vector.shape_cast %33 : vector<1x4x16xf32> to vector<4x16xf32>
    %c0_36 = arith.constant 0 : index
    %c267 = arith.constant 267 : index
    %35 = vector.load %arg6[%c0_36, %c267] : memref<4x528xf32, #tpu.memory_space<vmem>>, vector<4x16xf32>
    tpu.vector_store %arg6[%c0_36, %c267], %34 {strides = array<i32>} : memref<4x528xf32, #tpu.memory_space<vmem>>, vector<4x16xf32>,
    %c0_37 = arith.constant 0 : index
    %c0_38 = arith.constant 0 : index
    %c160 = arith.constant 160 : index
    %36 = vector.load %arg1[%c0_37, %c0_38, %c160] : memref<1x4x256xf32, #tpu.memory_space<vmem>>, vector<1x4x16xf32>
    %37 = vector.shape_cast %36 : vector<1x4x16xf32> to vector<4x16xf32>
    %c0_39 = arith.constant 0 : index
    %c289 = arith.constant 289 : index
    %38 = vector.load %arg6[%c0_39, %c289] : memref<4x528xf32, #tpu.memory_space<vmem>>, vector<4x16xf32>
    tpu.vector_store %arg6[%c0_39, %c289], %37 {strides = array<i32>} : memref<4x528xf32, #tpu.memory_space<vmem>>, vector<4x16xf32>,
    %c0_40 = arith.constant 0 : index
    %c0_41 = arith.constant 0 : index
    %c176 = arith.constant 176 : index
    %39 = vector.load %arg1[%c0_40, %c0_41, %c176] : memref<1x4x256xf32, #tpu.memory_space<vmem>>, vector<1x4x16xf32>
    %40 = vector.shape_cast %39 : vector<1x4x16xf32> to vector<4x16xf32>
    %c0_42 = arith.constant 0 : index
    %c311 = arith.constant 311 : index
    %41 = vector.load %arg6[%c0_42, %c311] : memref<4x528xf32, #tpu.memory_space<vmem>>, vector<4x16xf32>
    tpu.vector_store %arg6[%c0_42, %c311], %40 {strides = array<i32>} : memref<4x528xf32, #tpu.memory_space<vmem>>, vector<4x16xf32>,
    %c0_43 = arith.constant 0 : index
    %c0_44 = arith.constant 0 : index
    %c192 = arith.constant 192 : index
    %42 = vector.load %arg1[%c0_43, %c0_44, %c192] : memref<1x4x256xf32, #tpu.memory_space<vmem>>, vector<1x4x16xf32>
    %43 = vector.shape_cast %42 : vector<1x4x16xf32> to vector<4x16xf32>
    %c0_45 = arith.constant 0 : index
    %c333 = arith.constant 333 : index
    %44 = vector.load %arg6[%c0_45, %c333] : memref<4x528xf32, #tpu.memory_space<vmem>>, vector<4x16xf32>
    tpu.vector_store %arg6[%c0_45, %c333], %43 {strides = array<i32>} : memref<4x528xf32, #tpu.memory_space<vmem>>, vector<4x16xf32>,
    %c0_46 = arith.constant 0 : index
    %c0_47 = arith.constant 0 : index
    %c208 = arith.constant 208 : index
    %45 = vector.load %arg1[%c0_46, %c0_47, %c208] : memref<1x4x256xf32, #tpu.memory_space<vmem>>, vector<1x4x16xf32>
    %46 = vector.shape_cast %45 : vector<1x4x16xf32> to vector<4x16xf32>
    %c0_48 = arith.constant 0 : index
    %c355 = arith.constant 355 : index
    %47 = vector.load %arg6[%c0_48, %c355] : memref<4x528xf32, #tpu.memory_space<vmem>>, vector<4x16xf32>
    tpu.vector_store %arg6[%c0_48, %c355], %46 {strides = array<i32>} : memref<4x528xf32, #tpu.memory_space<vmem>>, vector<4x16xf32>,
    %c0_49 = arith.constant 0 : index
    %c0_50 = arith.constant 0 : index
    %c224 = arith.constant 224 : index
    %48 = vector.load %arg1[%c0_49, %c0_50, %c224] : memref<1x4x256xf32, #tpu.memory_space<vmem>>, vector<1x4x16xf32>
    %49 = vector.shape_cast %48 : vector<1x4x16xf32> to vector<4x16xf32>
    %c0_51 = arith.constant 0 : index
    %c377 = arith.constant 377 : index
    %50 = vector.load %arg6[%c0_51, %c377] : memref<4x528xf32, #tpu.memory_space<vmem>>, vector<4x16xf32>
    tpu.vector_store %arg6[%c0_51, %c377], %49 {strides = array<i32>} : memref<4x528xf32, #tpu.memory_space<vmem>>, vector<4x16xf32>,
    %c0_52 = arith.constant 0 : index
    %c0_53 = arith.constant 0 : index
    %c240 = arith.constant 240 : index
    %51 = vector.load %arg1[%c0_52, %c0_53, %c240] : memref<1x4x256xf32, #tpu.memory_space<vmem>>, vector<1x4x16xf32>
    %52 = vector.shape_cast %51 : vector<1x4x16xf32> to vector<4x16xf32>
    %c0_54 = arith.constant 0 : index
    %c399 = arith.constant 399 : index
    %53 = vector.load %arg6[%c0_54, %c399] : memref<4x528xf32, #tpu.memory_space<vmem>>, vector<4x16xf32>
    tpu.vector_store %arg6[%c0_54, %c399], %52 {strides = array<i32>} : memref<4x528xf32, #tpu.memory_space<vmem>>, vector<4x16xf32>,
    %c0_55 = arith.constant 0 : index
    %c44 = arith.constant 44 : index
    %54 = vector.load %arg6[%c0_55, %c44] : memref<4x528xf32, #tpu.memory_space<vmem>>, vector<4x396xf32>
    %c0_56 = arith.constant 0 : index
    %c0_57 = arith.constant 0 : index
    %55 = vector.load %arg7[%c0_56, %c0_57] : memref<48x396xf32, #tpu.memory_space<vmem>>, vector<4x396xf32>
    tpu.vector_store %arg7[%c0_56, %c0_57], %54 {strides = array<i32>} : memref<48x396xf32, #tpu.memory_space<vmem>>, vector<4x396xf32>,
    %c0_58 = arith.constant 0 : index
    %c45 = arith.constant 45 : index
    %56 = vector.load %arg6[%c0_58, %c45] : memref<4x528xf32, #tpu.memory_space<vmem>>, vector<4x396xf32>
    %c4 = arith.constant 4 : index
    %c0_59 = arith.constant 0 : index
    %57 = vector.load %arg7[%c4, %c0_59] : memref<48x396xf32, #tpu.memory_space<vmem>>, vector<4x396xf32>
    tpu.vector_store %arg7[%c4, %c0_59], %56 {strides = array<i32>} : memref<48x396xf32, #tpu.memory_space<vmem>>, vector<4x396xf32>,
    %c0_60 = arith.constant 0 : index
    %c46 = arith.constant 46 : index
    %58 = vector.load %arg6[%c0_60, %c46] : memref<4x528xf32, #tpu.memory_space<vmem>>, vector<4x396xf32>
    %c8 = arith.constant 8 : index
    %c0_61 = arith.constant 0 : index
    %59 = vector.load %arg7[%c8, %c0_61] : memref<48x396xf32, #tpu.memory_space<vmem>>, vector<4x396xf32>
    tpu.vector_store %arg7[%c8, %c0_61], %58 {strides = array<i32>} : memref<48x396xf32, #tpu.memory_space<vmem>>, vector<4x396xf32>,
    %c0_62 = arith.constant 0 : index
    %c69_63 = arith.constant 69 : index
    %60 = vector.load %arg6[%c0_62, %c69_63] : memref<4x528xf32, #tpu.memory_space<vmem>>, vector<4x396xf32>
    %c12 = arith.constant 12 : index
    %c0_64 = arith.constant 0 : index
    %61 = vector.load %arg7[%c12, %c0_64] : memref<48x396xf32, #tpu.memory_space<vmem>>, vector<4x396xf32>
    tpu.vector_store %arg7[%c12, %c0_64], %60 {strides = array<i32>} : memref<48x396xf32, #tpu.memory_space<vmem>>, vector<4x396xf32>,
    %c0_65 = arith.constant 0 : index
    %c70 = arith.constant 70 : index
    %62 = vector.load %arg6[%c0_65, %c70] : memref<4x528xf32, #tpu.memory_space<vmem>>, vector<4x396xf32>
    %c16_66 = arith.constant 16 : index
    %c0_67 = arith.constant 0 : index
    %63 = vector.load %arg7[%c16_66, %c0_67] : memref<48x396xf32, #tpu.memory_space<vmem>>, vector<4x396xf32>
    tpu.vector_store %arg7[%c16_66, %c0_67], %62 {strides = array<i32>} : memref<48x396xf32, #tpu.memory_space<vmem>>, vector<4x396xf32>,
    %c0_68 = arith.constant 0 : index
    %c71 = arith.constant 71 : index
    %64 = vector.load %arg6[%c0_68, %c71] : memref<4x528xf32, #tpu.memory_space<vmem>>, vector<4x396xf32>
    %c20 = arith.constant 20 : index
    %c0_69 = arith.constant 0 : index
    %65 = vector.load %arg7[%c20, %c0_69] : memref<48x396xf32, #tpu.memory_space<vmem>>, vector<4x396xf32>
    tpu.vector_store %arg7[%c20, %c0_69], %64 {strides = array<i32>} : memref<48x396xf32, #tpu.memory_space<vmem>>, vector<4x396xf32>,
    %c0_70 = arith.constant 0 : index
    %c3_71 = arith.constant 3 : index
    %66 = vector.load %arg6[%c0_70, %c3_71] : memref<4x528xf32, #tpu.memory_space<vmem>>, vector<4x396xf32>
    %c24 = arith.constant 24 : index
    %c0_72 = arith.constant 0 : index
    %67 = vector.load %arg7[%c24, %c0_72] : memref<48x396xf32, #tpu.memory_space<vmem>>, vector<4x396xf32>
    tpu.vector_store %arg7[%c24, %c0_72], %66 {strides = array<i32>} : memref<48x396xf32, #tpu.memory_space<vmem>>, vector<4x396xf32>,
    %c0_73 = arith.constant 0 : index
    %c25 = arith.constant 25 : index
    %68 = vector.load %arg6[%c0_73, %c25] : memref<4x528xf32, #tpu.memory_space<vmem>>, vector<4x396xf32>
    %c28 = arith.constant 28 : index
    %c0_74 = arith.constant 0 : index
    %69 = vector.load %arg7[%c28, %c0_74] : memref<48x396xf32, #tpu.memory_space<vmem>>, vector<4x396xf32>
    tpu.vector_store %arg7[%c28, %c0_74], %68 {strides = array<i32>} : memref<48x396xf32, #tpu.memory_space<vmem>>, vector<4x396xf32>,
    %c0_75 = arith.constant 0 : index
    %c47 = arith.constant 47 : index
    %70 = vector.load %arg6[%c0_75, %c47] : memref<4x528xf32, #tpu.memory_space<vmem>>, vector<4x396xf32>
    %c32_76 = arith.constant 32 : index
    %c0_77 = arith.constant 0 : index
    %71 = vector.load %arg7[%c32_76, %c0_77] : memref<48x396xf32, #tpu.memory_space<vmem>>, vector<4x396xf32>
    tpu.vector_store %arg7[%c32_76, %c0_77], %70 {strides = array<i32>} : memref<48x396xf32, #tpu.memory_space<vmem>>, vector<4x396xf32>,
    %c0_78 = arith.constant 0 : index
    %c68 = arith.constant 68 : index
    %72 = vector.load %arg6[%c0_78, %c68] : memref<4x528xf32, #tpu.memory_space<vmem>>, vector<4x396xf32>
    %c36 = arith.constant 36 : index
    %c0_79 = arith.constant 0 : index
    %73 = vector.load %arg7[%c36, %c0_79] : memref<48x396xf32, #tpu.memory_space<vmem>>, vector<4x396xf32>
    tpu.vector_store %arg7[%c36, %c0_79], %72 {strides = array<i32>} : memref<48x396xf32, #tpu.memory_space<vmem>>, vector<4x396xf32>,
    %c0_80 = arith.constant 0 : index
    %c90 = arith.constant 90 : index
    %74 = vector.load %arg6[%c0_80, %c90] : memref<4x528xf32, #tpu.memory_space<vmem>>, vector<4x396xf32>
    %c40 = arith.constant 40 : index
    %c0_81 = arith.constant 0 : index
    %75 = vector.load %arg7[%c40, %c0_81] : memref<48x396xf32, #tpu.memory_space<vmem>>, vector<4x396xf32>
    tpu.vector_store %arg7[%c40, %c0_81], %74 {strides = array<i32>} : memref<48x396xf32, #tpu.memory_space<vmem>>, vector<4x396xf32>,
    %c0_82 = arith.constant 0 : index
    %c112_83 = arith.constant 112 : index
    %76 = vector.load %arg6[%c0_82, %c112_83] : memref<4x528xf32, #tpu.memory_space<vmem>>, vector<4x396xf32>
    %c44_84 = arith.constant 44 : index
    %c0_85 = arith.constant 0 : index
    %77 = vector.load %arg7[%c44_84, %c0_85] : memref<48x396xf32, #tpu.memory_space<vmem>>, vector<4x396xf32>
    tpu.vector_store %arg7[%c44_84, %c0_85], %76 {strides = array<i32>} : memref<48x396xf32, #tpu.memory_space<vmem>>, vector<4x396xf32>,
    %c0_86 = arith.constant 0 : index
    %c0_87 = arith.constant 0 : index
    %78 = vector.load %arg2[%c0_86, %c0_87] : memref<8x48xf32, #tpu.memory_space<vmem>>, vector<8x48xf32>
    %c0_88 = arith.constant 0 : index
    %c0_89 = arith.constant 0 : index
    %79 = vector.load %arg7[%c0_88, %c0_89] : memref<48x396xf32, #tpu.memory_space<vmem>>, vector<48x396xf32>
    %cst_90 = arith.constant dense<0.000000e+00> : vector<8x396xf32>
    %80 = tpu.matmul %78, %79, %cst_90 {dimension_numbers = #tpu.dot_dimension_numbers<[1], [0], [0], [1], [0, 0, 1, 1], [], []>} : vector<8x48xf32>, vector<48x396xf32>, vector<8x396xf32> -> vector<8x396xf32>
    %81 = vector.broadcast %0 : vector<8x1xf32> to vector<8x396xf32>
    %82 = arith.mulf %80, %81 : vector<8x396xf32>
    %83 = vector.broadcast %1 : vector<8x1xf32> to vector<8x396xf32>
    %84 = arith.addf %82, %83 : vector<8x396xf32>
    %85 = arith.negf %84 : vector<8x396xf32>
    %86 = math.exp %85 : vector<8x396xf32>
    %cst_91 = arith.constant 1.000000e+00 : f32
    %87 = vector.broadcast %cst_91 : f32 to vector<8x396xf32>
    %88 = arith.addf %87, %86 : vector<8x396xf32>
    %89 = arith.divf %87, %88 : vector<8x396xf32>
    %90 = arith.mulf %84, %89 : vector<8x396xf32>
    %c0_92 = arith.constant 0 : index
    %c0_93 = arith.constant 0 : index
    %91 = vector.load %arg8[%c0_92, %c0_93] : memref<8x396xf32, #tpu.memory_space<vmem>>, vector<8x396xf32>
    tpu.vector_store %arg8[%c0_92, %c0_93], %90 {strides = array<i32>} : memref<8x396xf32, #tpu.memory_space<vmem>>, vector<8x396xf32>,
    %c0_94 = arith.constant 0 : index
    %c0_95 = arith.constant 0 : index
    %92 = vector.load %arg8[%c0_94, %c0_95] : memref<8x396xf32, #tpu.memory_space<vmem>>, vector<8x352xf32>
    %c0_96 = arith.constant 0 : index
    %c0_97 = arith.constant 0 : index
    %93 = vector.load %arg9[%c0_96, %c0_97] : memref<32x352xf32, #tpu.memory_space<vmem>>, vector<8x352xf32>
    tpu.vector_store %arg9[%c0_96, %c0_97], %92 {strides = array<i32>} : memref<32x352xf32, #tpu.memory_space<vmem>>, vector<8x352xf32>,
    %c0_98 = arith.constant 0 : index
    %c1_99 = arith.constant 1 : index
    %94 = vector.load %arg8[%c0_98, %c1_99] : memref<8x396xf32, #tpu.memory_space<vmem>>, vector<8x352xf32>
    %c8_100 = arith.constant 8 : index
    %c0_101 = arith.constant 0 : index
    %95 = vector.load %arg9[%c8_100, %c0_101] : memref<32x352xf32, #tpu.memory_space<vmem>>, vector<8x352xf32>
    tpu.vector_store %arg9[%c8_100, %c0_101], %94 {strides = array<i32>} : memref<32x352xf32, #tpu.memory_space<vmem>>, vector<8x352xf32>,
    %c0_102 = arith.constant 0 : index
    %c22 = arith.constant 22 : index
    %96 = vector.load %arg8[%c0_102, %c22] : memref<8x396xf32, #tpu.memory_space<vmem>>, vector<8x352xf32>
    %c16_103 = arith.constant 16 : index
    %c0_104 = arith.constant 0 : index
    %97 = vector.load %arg9[%c16_103, %c0_104] : memref<32x352xf32, #tpu.memory_space<vmem>>, vector<8x352xf32>
    tpu.vector_store %arg9[%c16_103, %c0_104], %96 {strides = array<i32>} : memref<32x352xf32, #tpu.memory_space<vmem>>, vector<8x352xf32>,
    %c0_105 = arith.constant 0 : index
    %c23 = arith.constant 23 : index
    %98 = vector.load %arg8[%c0_105, %c23] : memref<8x396xf32, #tpu.memory_space<vmem>>, vector<8x352xf32>
    %c24_106 = arith.constant 24 : index
    %c0_107 = arith.constant 0 : index
    %99 = vector.load %arg9[%c24_106, %c0_107] : memref<32x352xf32, #tpu.memory_space<vmem>>, vector<8x352xf32>
    tpu.vector_store %arg9[%c24_106, %c0_107], %98 {strides = array<i32>} : memref<32x352xf32, #tpu.memory_space<vmem>>, vector<8x352xf32>,
    %c0_108 = arith.constant 0 : index
    %c0_109 = arith.constant 0 : index
    %100 = vector.load %arg3[%c0_108, %c0_109] : memref<8x32xf32, #tpu.memory_space<vmem>>, vector<8x32xf32>
    %c0_110 = arith.constant 0 : index
    %c0_111 = arith.constant 0 : index
    %101 = vector.load %arg9[%c0_110, %c0_111] : memref<32x352xf32, #tpu.memory_space<vmem>>, vector<32x352xf32>
    %cst_112 = arith.constant dense<0.000000e+00> : vector<8x352xf32>
    %102 = tpu.matmul %100, %101, %cst_112 {dimension_numbers = #tpu.dot_dimension_numbers<[1], [0], [0], [1], [0, 0, 1, 1], [], []>} : vector<8x32xf32>, vector<32x352xf32>, vector<8x352xf32> -> vector<8x352xf32>
    %103 = vector.broadcast %2 : vector<8x1xf32> to vector<8x352xf32>
    %104 = arith.mulf %102, %103 : vector<8x352xf32>
    %105 = vector.broadcast %3 : vector<8x1xf32> to vector<8x352xf32>
    %106 = arith.addf %104, %105 : vector<8x352xf32>
    %107 = arith.negf %106 : vector<8x352xf32>
    %108 = math.exp %107 : vector<8x352xf32>
    %cst_113 = arith.constant 1.000000e+00 : f32
    %109 = vector.broadcast %cst_113 : f32 to vector<8x352xf32>
    %110 = arith.addf %109, %108 : vector<8x352xf32>
    %111 = arith.divf %109, %110 : vector<8x352xf32>
    %112 = arith.mulf %106, %111 : vector<8x352xf32>
    %113 = vector.extract_strided_slice %112 {offsets = [0, 0], sizes = [8, 16], strides = [1, 1]} : vector<8x352xf32> to vector<8x16xf32>
    %c0_114 = arith.constant 0 : index
    %c0_115 = arith.constant 0 : index
    %c0_116 = arith.constant 0 : index
    %114 = vector.load %arg5[%c0_114, %c0_115, %c0_116] : memref<1x8x256xf32, #tpu.memory_space<vmem>>, vector<1x8x16xf32>
    %115 = vector.shape_cast %114 : vector<1x8x16xf32> to vector<8x16xf32>
    %116 = vector.shape_cast %113 : vector<8x16xf32> to vector<1x8x16xf32>
    tpu.vector_store %arg5[%c0_114, %c0_115, %c0_116], %116 {strides = array<i32>} : memref<1x8x256xf32, #tpu.memory_space<vmem>>, vector<1x8x16xf32>,
    %117 = vector.extract_strided_slice %112 {offsets = [0, 22], sizes = [8, 16], strides = [1, 1]} : vector<8x352xf32> to vector<8x16xf32>
    %c0_117 = arith.constant 0 : index
    %c0_118 = arith.constant 0 : index
    %c16_119 = arith.constant 16 : index
    %118 = vector.load %arg5[%c0_117, %c0_118, %c16_119] : memref<1x8x256xf32, #tpu.memory_space<vmem>>, vector<1x8x16xf32>
    %119 = vector.shape_cast %118 : vector<1x8x16xf32> to vector<8x16xf32>
    %120 = vector.shape_cast %117 : vector<8x16xf32> to vector<1x8x16xf32>
    tpu.vector_store %arg5[%c0_117, %c0_118, %c16_119], %120 {strides = array<i32>} : memref<1x8x256xf32, #tpu.memory_space<vmem>>, vector<1x8x16xf32>,
    %121 = vector.extract_strided_slice %112 {offsets = [0, 44], sizes = [8, 16], strides = [1, 1]} : vector<8x352xf32> to vector<8x16xf32>
    %c0_120 = arith.constant 0 : index
    %c0_121 = arith.constant 0 : index
    %c32_122 = arith.constant 32 : index
    %122 = vector.load %arg5[%c0_120, %c0_121, %c32_122] : memref<1x8x256xf32, #tpu.memory_space<vmem>>, vector<1x8x16xf32>
    %123 = vector.shape_cast %122 : vector<1x8x16xf32> to vector<8x16xf32>
    %124 = vector.shape_cast %121 : vector<8x16xf32> to vector<1x8x16xf32>
    tpu.vector_store %arg5[%c0_120, %c0_121, %c32_122], %124 {strides = array<i32>} : memref<1x8x256xf32, #tpu.memory_space<vmem>>, vector<1x8x16xf32>,
    %125 = vector.extract_strided_slice %112 {offsets = [0, 66], sizes = [8, 16], strides = [1, 1]} : vector<8x352xf32> to vector<8x16xf32>
    %c0_123 = arith.constant 0 : index
    %c0_124 = arith.constant 0 : index
    %c48_125 = arith.constant 48 : index
    %126 = vector.load %arg5[%c0_123, %c0_124, %c48_125] : memref<1x8x256xf32, #tpu.memory_space<vmem>>, vector<1x8x16xf32>
    %127 = vector.shape_cast %126 : vector<1x8x16xf32> to vector<8x16xf32>
    %128 = vector.shape_cast %125 : vector<8x16xf32> to vector<1x8x16xf32>
    tpu.vector_store %arg5[%c0_123, %c0_124, %c48_125], %128 {strides = array<i32>} : memref<1x8x256xf32, #tpu.memory_space<vmem>>, vector<1x8x16xf32>,
    %129 = vector.extract_strided_slice %112 {offsets = [0, 88], sizes = [8, 16], strides = [1, 1]} : vector<8x352xf32> to vector<8x16xf32>
    %c0_126 = arith.constant 0 : index
    %c0_127 = arith.constant 0 : index
    %c64_128 = arith.constant 64 : index
    %130 = vector.load %arg5[%c0_126, %c0_127, %c64_128] : memref<1x8x256xf32, #tpu.memory_space<vmem>>, vector<1x8x16xf32>
    %131 = vector.shape_cast %130 : vector<1x8x16xf32> to vector<8x16xf32>
    %132 = vector.shape_cast %129 : vector<8x16xf32> to vector<1x8x16xf32>
    tpu.vector_store %arg5[%c0_126, %c0_127, %c64_128], %132 {strides = array<i32>} : memref<1x8x256xf32, #tpu.memory_space<vmem>>, vector<1x8x16xf32>,
    %133 = vector.extract_strided_slice %112 {offsets = [0, 110], sizes = [8, 16], strides = [1, 1]} : vector<8x352xf32> to vector<8x16xf32>
    %c0_129 = arith.constant 0 : index
    %c0_130 = arith.constant 0 : index
    %c80_131 = arith.constant 80 : index
    %134 = vector.load %arg5[%c0_129, %c0_130, %c80_131] : memref<1x8x256xf32, #tpu.memory_space<vmem>>, vector<1x8x16xf32>
    %135 = vector.shape_cast %134 : vector<1x8x16xf32> to vector<8x16xf32>
    %136 = vector.shape_cast %133 : vector<8x16xf32> to vector<1x8x16xf32>
    tpu.vector_store %arg5[%c0_129, %c0_130, %c80_131], %136 {strides = array<i32>} : memref<1x8x256xf32, #tpu.memory_space<vmem>>, vector<1x8x16xf32>,
    %137 = vector.extract_strided_slice %112 {offsets = [0, 132], sizes = [8, 16], strides = [1, 1]} : vector<8x352xf32> to vector<8x16xf32>
    %c0_132 = arith.constant 0 : index
    %c0_133 = arith.constant 0 : index
    %c96_134 = arith.constant 96 : index
    %138 = vector.load %arg5[%c0_132, %c0_133, %c96_134] : memref<1x8x256xf32, #tpu.memory_space<vmem>>, vector<1x8x16xf32>
    %139 = vector.shape_cast %138 : vector<1x8x16xf32> to vector<8x16xf32>
    %140 = vector.shape_cast %137 : vector<8x16xf32> to vector<1x8x16xf32>
    tpu.vector_store %arg5[%c0_132, %c0_133, %c96_134], %140 {strides = array<i32>} : memref<1x8x256xf32, #tpu.memory_space<vmem>>, vector<1x8x16xf32>,
    %141 = vector.extract_strided_slice %112 {offsets = [0, 154], sizes = [8, 16], strides = [1, 1]} : vector<8x352xf32> to vector<8x16xf32>
    %c0_135 = arith.constant 0 : index
    %c0_136 = arith.constant 0 : index
    %c112_137 = arith.constant 112 : index
    %142 = vector.load %arg5[%c0_135, %c0_136, %c112_137] : memref<1x8x256xf32, #tpu.memory_space<vmem>>, vector<1x8x16xf32>
    %143 = vector.shape_cast %142 : vector<1x8x16xf32> to vector<8x16xf32>
    %144 = vector.shape_cast %141 : vector<8x16xf32> to vector<1x8x16xf32>
    tpu.vector_store %arg5[%c0_135, %c0_136, %c112_137], %144 {strides = array<i32>} : memref<1x8x256xf32, #tpu.memory_space<vmem>>, vector<1x8x16xf32>,
    %145 = vector.extract_strided_slice %112 {offsets = [0, 176], sizes = [8, 16], strides = [1, 1]} : vector<8x352xf32> to vector<8x16xf32>
    %c0_138 = arith.constant 0 : index
    %c0_139 = arith.constant 0 : index
    %c128_140 = arith.constant 128 : index
    %146 = vector.load %arg5[%c0_138, %c0_139, %c128_140] : memref<1x8x256xf32, #tpu.memory_space<vmem>>, vector<1x8x16xf32>
    %147 = vector.shape_cast %146 : vector<1x8x16xf32> to vector<8x16xf32>
    %148 = vector.shape_cast %145 : vector<8x16xf32> to vector<1x8x16xf32>
    tpu.vector_store %arg5[%c0_138, %c0_139, %c128_140], %148 {strides = array<i32>} : memref<1x8x256xf32, #tpu.memory_space<vmem>>, vector<1x8x16xf32>,
    %149 = vector.extract_strided_slice %112 {offsets = [0, 198], sizes = [8, 16], strides = [1, 1]} : vector<8x352xf32> to vector<8x16xf32>
    %c0_141 = arith.constant 0 : index
    %c0_142 = arith.constant 0 : index
    %c144_143 = arith.constant 144 : index
    %150 = vector.load %arg5[%c0_141, %c0_142, %c144_143] : memref<1x8x256xf32, #tpu.memory_space<vmem>>, vector<1x8x16xf32>
    %151 = vector.shape_cast %150 : vector<1x8x16xf32> to vector<8x16xf32>
    %152 = vector.shape_cast %149 : vector<8x16xf32> to vector<1x8x16xf32>
    tpu.vector_store %arg5[%c0_141, %c0_142, %c144_143], %152 {strides = array<i32>} : memref<1x8x256xf32, #tpu.memory_space<vmem>>, vector<1x8x16xf32>,
    %153 = vector.extract_strided_slice %112 {offsets = [0, 220], sizes = [8, 16], strides = [1, 1]} : vector<8x352xf32> to vector<8x16xf32>
    %c0_144 = arith.constant 0 : index
    %c0_145 = arith.constant 0 : index
    %c160_146 = arith.constant 160 : index
    %154 = vector.load %arg5[%c0_144, %c0_145, %c160_146] : memref<1x8x256xf32, #tpu.memory_space<vmem>>, vector<1x8x16xf32>
    %155 = vector.shape_cast %154 : vector<1x8x16xf32> to vector<8x16xf32>
    %156 = vector.shape_cast %153 : vector<8x16xf32> to vector<1x8x16xf32>
    tpu.vector_store %arg5[%c0_144, %c0_145, %c160_146], %156 {strides = array<i32>} : memref<1x8x256xf32, #tpu.memory_space<vmem>>, vector<1x8x16xf32>,
    %157 = vector.extract_strided_slice %112 {offsets = [0, 242], sizes = [8, 16], strides = [1, 1]} : vector<8x352xf32> to vector<8x16xf32>
    %c0_147 = arith.constant 0 : index
    %c0_148 = arith.constant 0 : index
    %c176_149 = arith.constant 176 : index
    %158 = vector.load %arg5[%c0_147, %c0_148, %c176_149] : memref<1x8x256xf32, #tpu.memory_space<vmem>>, vector<1x8x16xf32>
    %159 = vector.shape_cast %158 : vector<1x8x16xf32> to vector<8x16xf32>
    %160 = vector.shape_cast %157 : vector<8x16xf32> to vector<1x8x16xf32>
    tpu.vector_store %arg5[%c0_147, %c0_148, %c176_149], %160 {strides = array<i32>} : memref<1x8x256xf32, #tpu.memory_space<vmem>>, vector<1x8x16xf32>,
    %161 = vector.extract_strided_slice %112 {offsets = [0, 264], sizes = [8, 16], strides = [1, 1]} : vector<8x352xf32> to vector<8x16xf32>
    %c0_150 = arith.constant 0 : index
    %c0_151 = arith.constant 0 : index
    %c192_152 = arith.constant 192 : index
    %162 = vector.load %arg5[%c0_150, %c0_151, %c192_152] : memref<1x8x256xf32, #tpu.memory_space<vmem>>, vector<1x8x16xf32>
    %163 = vector.shape_cast %162 : vector<1x8x16xf32> to vector<8x16xf32>
    %164 = vector.shape_cast %161 : vector<8x16xf32> to vector<1x8x16xf32>
    tpu.vector_store %arg5[%c0_150, %c0_151, %c192_152], %164 {strides = array<i32>} : memref<1x8x256xf32, #tpu.memory_space<vmem>>, vector<1x8x16xf32>,
    %165 = vector.extract_strided_slice %112 {offsets = [0, 286], sizes = [8, 16], strides = [1, 1]} : vector<8x352xf32> to vector<8x16xf32>
    %c0_153 = arith.constant 0 : index
    %c0_154 = arith.constant 0 : index
    %c208_155 = arith.constant 208 : index
    %166 = vector.load %arg5[%c0_153, %c0_154, %c208_155] : memref<1x8x256xf32, #tpu.memory_space<vmem>>, vector<1x8x16xf32>
    %167 = vector.shape_cast %166 : vector<1x8x16xf32> to vector<8x16xf32>
    %168 = vector.shape_cast %165 : vector<8x16xf32> to vector<1x8x16xf32>
    tpu.vector_store %arg5[%c0_153, %c0_154, %c208_155], %168 {strides = array<i32>} : memref<1x8x256xf32, #tpu.memory_space<vmem>>, vector<1x8x16xf32>,
    %169 = vector.extract_strided_slice %112 {offsets = [0, 308], sizes = [8, 16], strides = [1, 1]} : vector<8x352xf32> to vector<8x16xf32>
    %c0_156 = arith.constant 0 : index
    %c0_157 = arith.constant 0 : index
    %c224_158 = arith.constant 224 : index
    %170 = vector.load %arg5[%c0_156, %c0_157, %c224_158] : memref<1x8x256xf32, #tpu.memory_space<vmem>>, vector<1x8x16xf32>
    %171 = vector.shape_cast %170 : vector<1x8x16xf32> to vector<8x16xf32>
    %172 = vector.shape_cast %169 : vector<8x16xf32> to vector<1x8x16xf32>
    tpu.vector_store %arg5[%c0_156, %c0_157, %c224_158], %172 {strides = array<i32>} : memref<1x8x256xf32, #tpu.memory_space<vmem>>, vector<1x8x16xf32>,
    %173 = vector.extract_strided_slice %112 {offsets = [0, 330], sizes = [8, 16], strides = [1, 1]} : vector<8x352xf32> to vector<8x16xf32>
    %c0_159 = arith.constant 0 : index
    %c0_160 = arith.constant 0 : index
    %c240_161 = arith.constant 240 : index
    %174 = vector.load %arg5[%c0_159, %c0_160, %c240_161] : memref<1x8x256xf32, #tpu.memory_space<vmem>>, vector<1x8x16xf32>
    %175 = vector.shape_cast %174 : vector<1x8x16xf32> to vector<8x16xf32>
    %176 = vector.shape_cast %173 : vector<8x16xf32> to vector<1x8x16xf32>
    tpu.vector_store %arg5[%c0_159, %c0_160, %c240_161], %176 {strides = array<i32>} : memref<1x8x256xf32, #tpu.memory_space<vmem>>, vector<1x8x16xf32>,
    return
  }
  func.func @transform_0(%arg0: i32) -> (i32, i32, i32) {
    %c0_i32 = arith.constant 0 : i32
    %c0_i32_0 = arith.constant 0 : i32
    %c0_i32_1 = arith.constant 0 : i32
    return %arg0, %c0_i32, %c0_i32_0 : i32, i32, i32
  }
  func.func @transform_1(%arg0: i32) -> (i32, i32) {
    %c0_i32 = arith.constant 0 : i32
    %c0_i32_0 = arith.constant 0 : i32
    %c0_i32_1 = arith.constant 0 : i32
    return %c0_i32, %c0_i32_0 : i32, i32
  }
  func.func @transform_2(%arg0: i32) -> (i32, i32) {
    %c0_i32 = arith.constant 0 : i32
    %c0_i32_0 = arith.constant 0 : i32
    %c0_i32_1 = arith.constant 0 : i32
    return %c0_i32, %c0_i32_0 : i32, i32
  }
  func.func @transform_3(%arg0: i32) -> (i32, i32) {
    %c0_i32 = arith.constant 0 : i32
    %c0_i32_0 = arith.constant 0 : i32
    %c0_i32_1 = arith.constant 0 : i32
    return %c0_i32, %c0_i32_0 : i32, i32
  }
  func.func @transform_4(%arg0: i32) -> (i32, i32, i32) {
    %c0_i32 = arith.constant 0 : i32
    %c0_i32_0 = arith.constant 0 : i32
    %c0_i32_1 = arith.constant 0 : i32
    return %arg0, %c0_i32, %c0_i32_0 : i32, i32, i32
  }
}

</mosaic_0001>

<llo_original>
// kernel: pconv_forward.1
$region0: #{pconv_forward.1}
  #allocation0 [shape = 'u32[]', space=smem, size = 0x4, offset = 0x4, fixed_abs, tag = 'smem constant byte address 0x4 - core index']
  #allocation1 [shape = 'u32[72,128]{1,0:T(1,128)}', space=vmem, size = 0x9000, scoped, tag = 'internal scratch']
  #allocation2 [shape = 'f32[4,528]{1,0:T(4,128)}', space=vmem, size = 0x2800, scoped, tag = 'scratch operand']
  #allocation3 [shape = 'f32[48,396]{1,0:T(8,128)}', space=vmem, size = 0x18000, scoped, tag = 'scratch operand']
  #allocation4 [shape = 'f32[8,396]{1,0:T(8,128)}', space=vmem, size = 0x4000, scoped, tag = 'scratch operand']
  #allocation5 [shape = 'f32[32,352]{1,0:T(8,128)}', space=vmem, size = 0xc000, scoped, tag = 'scratch operand']
  %s0 = inlined_call_operand.vmem [shape: f32[2,4,256], index: 0, kind: input, shape index: {}]
  %s1 = inlined_call_operand.vmem [shape: f32[8,48], index: 1, kind: input, shape index: {}]
  %s2 = inlined_call_operand.vmem [shape: f32[8,32], index: 2, kind: input, shape index: {}]
  %s3 = inlined_call_operand.vmem [shape: f32[8,4], index: 3, kind: input, shape index: {}]
  %s4 = inlined_call_operand.vmem [shape: f32[2,8,256], index: 4, kind: output, shape index: {}]
  %s5 = sld [smem:[#allocation0]]
  $region49: #{pconv_forward.1} parent=0
    _
  %s7 = ssub.s32 1, %s5
  %s8 = scalar_select 0, %s7, %s5
  loop: start=0, step=1, limit=4
  $region2: #{pconv_forward.1} parent=0 // loop_pre_header
    _
  $region3: #{pconv_forward.1} parent=0 // loop_header
    %s10 = sphi 0, %s14
    %p11 = scmp.ge.s32.totalorder %s10, 4
    %s20 = sphi 0, %s22
    %s23 = sphi 0, %s20
    %s24 = sphi 0, %s23
    %s40 = sphi 0, %s24
    %s44 = sphi 0, %s44
    %s46 = sphi 0, %s44
    %s47 = sphi 0, %s46
    %s61 = sphi 0, %s47
    %s65 = sphi 0, %s65
    %s67 = sphi 0, %s65
    %s68 = sphi 0, %s67
    %s82 = sphi 0, %s68
    %s86 = sphi 0, %s86
    %s88 = sphi 0, %s86
    %s89 = sphi 0, %s88
    %s103 = sphi 0, %s89
    %s109 = sphi 0, %s111
    %s112 = sphi 0, %s109
    %s113 = sphi 0, %s112
    %s129 = sphi 0, %s113
  $region4: #{pconv_forward.1} parent=0 // loop_header_branch
    %13 = sbr.rel (%p11) target = $region8
  $region5: #{pconv_forward.1} parent=0 // loop_body
    %s15 = ssub.s32 %s10, 1
    %s16 = ssub.s32 %s10, 2
    %s17 = sadd.s32 %s10, 1
    %s18 = ssub.s32 %s10, %s17
    %p19 = scmp.eq.s32.totalorder %s18, 0
    %s21 = sadd.s32 %s20, 1
    %s22 = scalar_select %p19, %s20, %s21
    %p25 = pneg %p19
    %p26 = scmp.eq.s32.totalorder %s10, 1
    %p27 = por %p25, %p26
    %p28 = scmp.ne.s32.totalorder %s20, %s23
    %p29 = scmp.eq.s32.totalorder %s10, 0
    %p30 = por %p28, %p29
    %p31 = scmp.ne.s32.totalorder %s20, %s23
    %p32 = scmp.eq.s32.totalorder %s15, 1
    %p33 = por %p31, %p32
    %p34 = scmp.ne.s32.totalorder %s23, %s24
    %p35 = scmp.eq.s32.totalorder %s15, 0
    %p36 = por %p34, %p35
    %p37 = scmp.ne.s32.totalorder %s23, %s24
    %p38 = scmp.eq.s32.totalorder %s16, 1
    %p39 = por %p37, %p38
    %p41 = scmp.ne.s32.totalorder %s24, %s40
    %p42 = scmp.eq.s32.totalorder %s16, 0
    %p43 = por %p41, %p42
    %s45 = sadd.s32 %s44, 1
    %p48 = scmp.eq.s32.totalorder %s10, 1
    %p49 = scmp.ne.s32.totalorder %s44, %s46
    %p50 = scmp.eq.s32.totalorder %s10, 0
    %p51 = por %p49, %p50
    %p52 = scmp.ne.s32.totalorder %s44, %s46
    %p53 = scmp.eq.s32.totalorder %s15, 1
    %p54 = por %p52, %p53
    %p55 = scmp.ne.s32.totalorder %s46, %s47
    %p56 = scmp.eq.s32.totalorder %s15, 0
    %p57 = por %p55, %p56
    %p58 = scmp.ne.s32.totalorder %s46, %s47
    %p59 = scmp.eq.s32.totalorder %s16, 1
    %p60 = por %p58, %p59
    %p62 = scmp.ne.s32.totalorder %s47, %s61
    %p63 = scmp.eq.s32.totalorder %s16, 0
    %p64 = por %p62, %p63
    %s66 = sadd.s32 %s65, 1
    %p69 = scmp.eq.s32.totalorder %s10, 1
    %p70 = scmp.ne.s32.totalorder %s65, %s67
    %p71 = scmp.eq.s32.totalorder %s10, 0
    %p72 = por %p70, %p71
    %p73 = scmp.ne.s32.totalorder %s65, %s67
    %p74 = scmp.eq.s32.totalorder %s15, 1
    %p75 = por %p73, %p74
    %p76 = scmp.ne.s32.totalorder %s67, %s68
    %p77 = scmp.eq.s32.totalorder %s15, 0
    %p78 = por %p76, %p77
    %p79 = scmp.ne.s32.totalorder %s67, %s68
    %p80 = scmp.eq.s32.totalorder %s16, 1
    %p81 = por %p79, %p80
    %p83 = scmp.ne.s32.totalorder %s68, %s82
    %p84 = scmp.eq.s32.totalorder %s16, 0
    %p85 = por %p83, %p84
    %s87 = sadd.s32 %s86, 1
    %p90 = scmp.eq.s32.totalorder %s10, 1
    %p91 = scmp.ne.s32.totalorder %s86, %s88
    %p92 = scmp.eq.s32.totalorder %s10, 0
    %p93 = por %p91, %p92
    %p94 = scmp.ne.s32.totalorder %s86, %s88
    %p95 = scmp.eq.s32.totalorder %s15, 1
    %p96 = por %p94, %p95
    %p97 = scmp.ne.s32.totalorder %s88, %s89
    %p98 = scmp.eq.s32.totalorder %s15, 0
    %p99 = por %p97, %p98
    %p100 = scmp.ne.s32.totalorder %s88, %s89
    %p101 = scmp.eq.s32.totalorder %s16, 1
    %p102 = por %p100, %p101
    %p104 = scmp.ne.s32.totalorder %s89, %s103
    %p105 = scmp.eq.s32.totalorder %s16, 0
    %p106 = por %p104, %p105
    %s107 = ssub.s32 %s10, %s17
    %p108 = scmp.eq.s32.totalorder %s107, 0
    %s110 = sadd.s32 %s109, 1
    %s111 = scalar_select %p108, %s109, %s110
    %p114 = pneg %p108
    %p115 = scmp.eq.s32.totalorder %s10, 1
    %p116 = por %p114, %p115
    %p117 = scmp.ne.s32.totalorder %s109, %s112
    %p118 = scmp.eq.s32.totalorder %s10, 0
    %p119 = por %p117, %p118
    %p120 = scmp.ne.s32.totalorder %s109, %s112
    %p121 = scmp.eq.s32.totalorder %s15, 1
    %p122 = por %p120, %p121
    %p123 = scmp.ne.s32.totalorder %s112, %s113
    %p124 = scmp.eq.s32.totalorder %s15, 0
    %p125 = por %p123, %p124
    %p126 = scmp.ne.s32.totalorder %s112, %s113
    %p127 = scmp.eq.s32.totalorder %s16, 1
    %p128 = por %p126, %p127
    %p130 = scmp.ne.s32.totalorder %s113, %s129
    %p131 = scmp.eq.s32.totalorder %s16, 0
    %p132 = por %p130, %p131
    %p133 = scmp.le.s32.totalorder 1, %s10
    %p134 = scmp.lt.s32.totalorder %s10, 3
    %p135 = pnand %p133, %p134
    %p136 = pneg %p135
    // Predicated region
    $region9: #{pconv_forward.1} parent=5 // pred_check
      _
    $region10: #{pconv_forward.1} parent=5 // pred_check_branch
      %138 = sbr.rel (%p135) target = $region12
    $region11: #{pconv_forward.1} parent=5 // pred_region
      %s139 = ssub.s32 %s10, 1
      // Predicated region
      $region13: #{pconv_forward.1} parent=11 // pred_check
        %p140 = pneg %p57
      $region14: #{pconv_forward.1} parent=11 // pred_check_branch
        %142 = sbr.rel (%p140) target = $region16
      $region15: #{pconv_forward.1} parent=11 // pred_region
        _
      $region16: #{pconv_forward.1} parent=11 // pred_fallthru
        _
      // Predicated region
      $region17: #{pconv_forward.1} parent=11 // pred_check
        %p143 = pneg %p78
      $region18: #{pconv_forward.1} parent=11 // pred_check_branch
        %145 = sbr.rel (%p143) target = $region20
      $region19: #{pconv_forward.1} parent=11 // pred_region
        _
      $region20: #{pconv_forward.1} parent=11 // pred_fallthru
        _
      // Predicated region
      $region21: #{pconv_forward.1} parent=11 // pred_check
        %p146 = pneg %p99
      $region22: #{pconv_forward.1} parent=11 // pred_check_branch
        %148 = sbr.rel (%p146) target = $region24
      $region23: #{pconv_forward.1} parent=11 // pred_region
        _
      $region24: #{pconv_forward.1} parent=11 // pred_fallthru
        _
    $region12: #{pconv_forward.1} parent=5 // pred_fallthru
      _
    %p149 = scmp.lt.s32.totalorder %s10, 2
    // Predicated region
    $region25: #{pconv_forward.1} parent=5 // pred_check
      %p150 = pneg %p149
    $region26: #{pconv_forward.1} parent=5 // pred_check_branch
      %152 = sbr.rel (%p150) target = $region28
    $region27: #{pconv_forward.1} parent=5 // pred_region
      // Predicated region
      $region29: #{pconv_forward.1} parent=27 // pred_check
        %p153 = pneg %p30
      $region30: #{pconv_forward.1} parent=27 // pred_check_branch
        %155 = sbr.rel (%p153) target = $region32
      $region31: #{pconv_forward.1} parent=27 // pred_region
        %p156 = scmp.lt.s32.totalorder %s10, 1
        %s157 = scalar_select %p156, %s10, 1
        %s158 = smul.addr %s157, 2
        %s159 = smul.addr %s158, 4
        %s160 = scalar_lea.vmem %s0, %s159
      $region32: #{pconv_forward.1} parent=27 // pred_fallthru
        _
    $region28: #{pconv_forward.1} parent=5 // pred_fallthru
      _
    %p161 = scmp.le.s32.totalorder 1, %s10
    %p162 = scmp.lt.s32.totalorder %s10, 3
    %p163 = pnand %p161, %p162
    %p164 = pneg %p163
    // Predicated region
    $region33: #{pconv_forward.1} parent=5 // pred_check
      _
    $region34: #{pconv_forward.1} parent=5 // pred_check_branch
      %166 = sbr.rel (%p163) target = $region36
    $region35: #{pconv_forward.1} parent=5 // pred_region
      %s167 = ssub.s32 %s10, 1
      %p168 = scmp.lt.s32.totalorder %s15, 1
      %s169 = scalar_select %p168, %s15, 1
      %s170 = smul.addr %s169, 2
      %s171 = smul.addr %s170, 4
      %s172 = scalar_lea.vmem %s0, %s171
      %p173 = pneg %p36
      %p174 = pneg %p33
      %p175 = pneg %p57
      %p176 = pneg %p54
      %p177 = pneg %p78
      %p178 = pneg %p75
      %p179 = pneg %p99
      %p180 = pneg %p96
      %p181 = pneg %p125
      %p182 = pneg %p122
      %p183 = scmp.lt.s32.totalorder %s15, 1
      %s184 = scalar_select %p183, %s15, 1
      %s185 = smul.addr %s184, 2
      %s186 = smul.addr %s185, 8
      %s187 = scalar_lea.vmem %s4, %s186
      %p188 = scmp.lt.s32.totalorder %s15, 1
      %s189 = scalar_select %p188, %s15, 1
      %s190 = smul.addr %s189, 2
      %s191 = smul.addr %s190, 4
      %s192 = scalar_lea.vmem %s0, %s191
      %p193 = scmp.lt.s32.totalorder %s15, 1
      %s194 = scalar_select %p193, %s15, 1
      %s195 = smul.addr %s194, 2
      %s196 = smul.addr %s195, 8
      %s197 = scalar_lea.vmem %s4, %s196
      %v198 = vld [vmem:[%s3] sm:$0xff]
      %199 = vst [vmem:[#allocation2] sm:$0xff] 0.0
      %200 = vst [vmem:[#allocation2 + $0x8] sm:$0xff] 0.0
      %vm201 = vcmask 125952
      %202 = vst.msk [vmem:[#allocation2 + $0x10] sm:$0xf] %vm201, 0.0
      %v203 = vld [vmem:[%s192] sm:$0xf]
      %205 = vrot.lane.b32.xlu0 %v203, 69
      %v206 = vpop.permute.xlu0 %205
      %vm208 = vcmask 691752
      %209 = vst.msk [vmem:[#allocation2] sm:$0xf] %vm208, %v206
      %v210 = vld [vmem:[%s192] sm:$0xf]
      %212 = vrot.lane.b32.xlu0 %v210, 75
      %v213 = vpop.permute.xlu0 %212
      %vm215 = vcmask 872152
      %216 = vst.msk [vmem:[#allocation2] sm:$0xf] %vm215, %v213
      %v217 = vld [vmem:[%s192] sm:$0xf]
      %219 = vrot.lane.b32.xlu0 %v217, 81
      %v220 = vpop.permute.xlu0 %219
      %v221 = vrot.slane %v220, 4
      %vm222 = vcmask 662528
      %v223 = vsel %vm222, %v221, %v220
      %vm225 = vcmask 1044360
      %vm226 = vcmask 7172
      %vm227 = vmor %vm226, %vm225
      %228 = vst.msk [vmem:[#allocation2] sm:$0xff] %vm227, %v223
      %v229 = vld [vmem:[%s192] sm:$0xf]
      %231 = vrot.lane.b32.xlu0 %v229, 87
      %v232 = vpop.permute.xlu0 %231
      %vm234 = vcmask 183352
      %235 = vst.msk [vmem:[#allocation2 + $0x4] sm:$0xf] %vm234, %v232
      %v236 = vld [vmem:[%s192] sm:$0xf]
      %238 = vrot.lane.b32.xlu0 %v236, 93
      %v239 = vpop.permute.xlu0 %238
      %vm241 = vcmask 363752
      %242 = vst.msk [vmem:[#allocation2 + $0x4] sm:$0xf] %vm241, %v239
      %v243 = vld [vmem:[%s192] sm:$0xf]
      %245 = vrot.lane.b32.xlu0 %v243, 99
      %v246 = vpop.permute.xlu0 %245
      %vm248 = vcmask 544152
      %249 = vst.msk [vmem:[#allocation2 + $0x4] sm:$0xf] %vm248, %v246
      %v250 = vld [vmem:[%s192] sm:$0xf]
      %252 = vrot.lane.b32.xlu0 %v250, 105
      %v253 = vpop.permute.xlu0 %252
      %vm255 = vcmask 724552
      %256 = vst.msk [vmem:[#allocation2 + $0x4] sm:$0xf] %vm255, %v253
      %v257 = vld [vmem:[%s192] sm:$0xf]
      %259 = vrot.lane.b32.xlu0 %v257, 111
      %v260 = vpop.permute.xlu0 %259
      %vm262 = vcmask 904952
      %263 = vst.msk [vmem:[#allocation2 + $0x4] sm:$0xf] %vm262, %v260
      %v264 = vld [vmem:[%s192 + $0x4] sm:$0xf]
      %266 = vrot.lane.b32.xlu0 %v264, 117
      %v267 = vpop.permute.xlu0 %266
      %v268 = vrot.slane %v267, 4
      %vm269 = vcmask 957440
      %v270 = vsel %vm269, %v268, %v267
      %vm272 = vcmask 1044392
      %vm273 = vcmask 39940
      %vm274 = vmor %vm273, %vm272
      %275 = vst.msk [vmem:[#allocation2 + $0x4] sm:$0xff] %vm274, %v270
      %v276 = vld [vmem:[%s192 + $0x4] sm:$0xf]
      %278 = vrot.lane.b32.xlu0 %v276, 123
      %v279 = vpop.permute.xlu0 %278
      %vm281 = vcmask 216152
      %282 = vst.msk [vmem:[#allocation2 + $0x8] sm:$0xf] %vm281, %v279
      %v283 = vld [vmem:[%s192 + $0x4] sm:$0xf]
      %285 = vrot.lane.b32.xlu0 %v283, 1
      %v286 = vpop.permute.xlu0 %285
      %vm288 = vcmask 396552
      %289 = vst.msk [vmem:[#allocation2 + $0x8] sm:$0xf] %vm288, %v286
      %v290 = vld [vmem:[%s192 + $0x4] sm:$0xf]
      %292 = vrot.lane.b32.xlu0 %v290, 7
      %v293 = vpop.permute.xlu0 %292
      %vm295 = vcmask 576952
      %296 = vst.msk [vmem:[#allocation2 + $0x8] sm:$0xf] %vm295, %v293
      %v297 = vld [vmem:[%s192 + $0x4] sm:$0xf]
      %299 = vrot.lane.b32.xlu0 %v297, 13
      %v300 = vpop.permute.xlu0 %299
      %vm302 = vcmask 757352
      %303 = vst.msk [vmem:[#allocation2 + $0x8] sm:$0xf] %vm302, %v300
      %v304 = vld [vmem:[%s192 + $0x4] sm:$0xf]
      %306 = vrot.lane.b32.xlu0 %v304, 19
      %v307 = vpop.permute.xlu0 %306
      %vm309 = vcmask 937752
      %310 = vst.msk [vmem:[#allocation2 + $0x8] sm:$0xf] %vm309, %v307
      %v311 = vld [vmem:[%s192 + $0x4] sm:$0xf]
      %313 = vrot.lane.b32.xlu0 %v311, 25
      %v314 = vpop.permute.xlu0 %313
      %v315 = vrot.slane %v314, 4
      %vm316 = vcmask 203776
      %v317 = vsel %vm316, %v315, %v314
      %vm319 = vcmask 1044424
      %vm320 = vcmask 72708
      %vm321 = vmor %vm320, %vm319
      %322 = vst.msk [vmem:[#allocation2 + $0x8] sm:$0xff] %vm321, %v317
      %v323 = vld [vmem:[%s192 + $0x4] sm:$0xf]
      %325 = vrot.lane.b32.xlu0 %v323, 31
      %v326 = vpop.permute.xlu0 %325
      %vm328 = vcmask 248952
      %329 = vst.msk [vmem:[#allocation2 + $0xc] sm:$0xf] %vm328, %v326
      %v330 = vld [vmem:[#allocation2] sm:$0xff]
      %v331 = vld [vmem:[#allocation2 + $0x8] sm:$0xff]
      %334 = vst [vmem:[#allocation1] ss:$2 sm:$0xff] %v330
      %s335 = scalar_lea.vmem [#allocation1], 16
      %336 = vst [vmem:[%s335] ss:$2 sm:$0xff] %v331
      %v337 = vld.sshfl [vmem:[#allocation1] sm:$0xff pattern:$0x75316420]
      %v338 = vld.sshfl [vmem:[#allocation1 + $0x8] sm:$0xff pattern:$0x75316420]
      %v339 = vld.sshfl [vmem:[#allocation1 + $0x10] sm:$0xff pattern:$0x75316420]
      %v340 = vld.sshfl [vmem:[#allocation1 + $0x18] sm:$0xff pattern:$0x75316420]
      %341 = vrot.lane.b32.xlu0 %v337, 84
      %v342 = vpop.permute.xlu0 %341
      %343 = vrot.lane.b32.xlu0 %v338, 84
      %v344 = vpop.permute.xlu0 %343
      %345 = vrot.lane.b32.xlu0 %v339, 84
      %v346 = vpop.permute.xlu0 %345
      %347 = vrot.lane.b32.xlu0 %v340, 84
      %v348 = vpop.permute.xlu0 %347
      %vm349 = vcmask 687104
      %v350 = vsel %vm349, %v342, %v344
      %v351 = vsel %vm349, %v344, %v346
      %v352 = vsel %vm349, %v346, %v348
      %357 = vst [vmem:[#allocation3] sm:$0xf] %v350
      %358 = vst [vmem:[#allocation3 + $0x8] sm:$0xf] %v351
      %359 = vst [vmem:[#allocation3 + $0x10] sm:$0xf] %v352
      %vm360 = vcmask 93184
      %361 = vst.msk [vmem:[#allocation3 + $0x18] sm:$0xf] %vm360, %v348
      %v362 = vld [vmem:[#allocation2] sm:$0xff]
      %v363 = vld [vmem:[#allocation2 + $0x8] sm:$0xff]
      %s366 = scalar_lea.vmem [#allocation1], 1
      %367 = vst [vmem:[%s366] ss:$2 sm:$0xff] %v362
      %s368 = scalar_lea.vmem [#allocation1], 17
      %369 = vst [vmem:[%s368] ss:$2 sm:$0xff] %v363
      %v370 = vld.sshfl [vmem:[#allocation1] sm:$0xff pattern:$0x75316420]
      %v371 = vld.sshfl [vmem:[#allocation1 + $0x8] sm:$0xff pattern:$0x75316420]
      %v372 = vld.sshfl [vmem:[#allocation1 + $0x10] sm:$0xff pattern:$0x75316420]
      %v373 = vld.sshfl [vmem:[#allocation1 + $0x18] sm:$0xff pattern:$0x75316420]
      %374 = vrot.lane.b32.xlu0 %v370, 83
      %v375 = vpop.permute.xlu0 %374
      %376 = vrot.lane.b32.xlu0 %v371, 83
      %v377 = vpop.permute.xlu0 %376
      %378 = vrot.lane.b32.xlu0 %v372, 83
      %v379 = vpop.permute.xlu0 %378
      %380 = vrot.lane.b32.xlu0 %v373, 83
      %v381 = vpop.permute.xlu0 %380
      %vm382 = vcmask 678912
      %v383 = vsel %vm382, %v375, %v377
      %v384 = vsel %vm382, %v377, %v379
      %v385 = vsel %vm382, %v379, %v381
      %390 = vst [vmem:[#allocation3] sm:$0xf0] %v383
      %391 = vst [vmem:[#allocation3 + $0x8] sm:$0xf0] %v384
      %392 = vst [vmem:[#allocation3 + $0x10] sm:$0xf0] %v385
      %vm393 = vcmask 97284
      %394 = vst.msk [vmem:[#allocation3 + $0x18] sm:$0xf0] %vm393, %v381
      %v395 = vld [vmem:[#allocation2] sm:$0xff]
      %v396 = vld [vmem:[#allocation2 + $0x8] sm:$0xff]
      %399 = vst [vmem:[#allocation1] ss:$2 sm:$0xff] %v395
      %s400 = scalar_lea.vmem [#allocation1], 16
      %401 = vst [vmem:[%s400] ss:$2 sm:$0xff] %v396
      %v402 = vld.sshfl [vmem:[#allocation1] sm:$0xff pattern:$0x75316420]
      %v403 = vld.sshfl [vmem:[#allocation1 + $0x8] sm:$0xff pattern:$0x75316420]
      %v404 = vld.sshfl [vmem:[#allocation1 + $0x10] sm:$0xff pattern:$0x75316420]
      %v405 = vld.sshfl [vmem:[#allocation1 + $0x18] sm:$0xff pattern:$0x75316420]
      %406 = vrot.lane.b32.xlu0 %v402, 82
      %v407 = vpop.permute.xlu0 %406
      %408 = vrot.lane.b32.xlu0 %v403, 82
      %v409 = vpop.permute.xlu0 %408
      %410 = vrot.lane.b32.xlu0 %v404, 82
      %v411 = vpop.permute.xlu0 %410
      %412 = vrot.lane.b32.xlu0 %v405, 82
      %v413 = vpop.permute.xlu0 %412
      %vm414 = vcmask 670720
      %v415 = vsel %vm414, %v407, %v409
      %v416 = vsel %vm414, %v409, %v411
      %v417 = vsel %vm414, %v411, %v413
      %422 = vst [vmem:[#allocation3 + $0x20] sm:$0xf] %v415
      %423 = vst [vmem:[#allocation3 + $0x28] sm:$0xf] %v416
      %424 = vst [vmem:[#allocation3 + $0x30] sm:$0xf] %v417
      %425 = vst.msk [vmem:[#allocation3 + $0x38] sm:$0xf] %vm360, %v413
      %v426 = vld [vmem:[#allocation2] sm:$0xff]
      %v427 = vld [vmem:[#allocation2 + $0x8] sm:$0xff]
      %s430 = scalar_lea.vmem [#allocation1], 1
      %431 = vst [vmem:[%s430] ss:$2 sm:$0xff] %v426
      %s432 = scalar_lea.vmem [#allocation1], 17
      %433 = vst [vmem:[%s432] ss:$2 sm:$0xff] %v427
      %v434 = vld.sshfl [vmem:[#allocation1] sm:$0xff pattern:$0x75316420]
      %v435 = vld.sshfl [vmem:[#allocation1 + $0x8] sm:$0xff pattern:$0x75316420]
      %v436 = vld.sshfl [vmem:[#allocation1 + $0x10] sm:$0xff pattern:$0x75316420]
      %v437 = vld.sshfl [vmem:[#allocation1 + $0x18] sm:$0xff pattern:$0x75316420]
      %438 = vrot.lane.b32.xlu0 %v434, 59
      %v439 = vpop.permute.xlu0 %438
      %440 = vrot.lane.b32.xlu0 %v435, 59
      %v441 = vpop.permute.xlu0 %440
      %442 = vrot.lane.b32.xlu0 %v436, 59
      %v443 = vpop.permute.xlu0 %442
      %444 = vrot.lane.b32.xlu0 %v437, 59
      %v445 = vpop.permute.xlu0 %444
      %vm446 = vcmask 482304
      %v447 = vsel %vm446, %v439, %v441
      %v448 = vsel %vm446, %v441, %v443
      %v449 = vsel %vm446, %v443, %v445
      %454 = vst [vmem:[#allocation3 + $0x20] sm:$0xf0] %v447
      %455 = vst [vmem:[#allocation3 + $0x28] sm:$0xf0] %v448
      %456 = vst [vmem:[#allocation3 + $0x30] sm:$0xf0] %v449
      %457 = vst.msk [vmem:[#allocation3 + $0x38] sm:$0xf0] %vm393, %v445
      %v458 = vld [vmem:[#allocation2] sm:$0xff]
      %v459 = vld [vmem:[#allocation2 + $0x8] sm:$0xff]
      %462 = vst [vmem:[#allocation1] ss:$2 sm:$0xff] %v458
      %s463 = scalar_lea.vmem [#allocation1], 16
      %464 = vst [vmem:[%s463] ss:$2 sm:$0xff] %v459
      %v465 = vld.sshfl [vmem:[#allocation1] sm:$0xff pattern:$0x75316420]
      %v466 = vld.sshfl [vmem:[#allocation1 + $0x8] sm:$0xff pattern:$0x75316420]
      %v467 = vld.sshfl [vmem:[#allocation1 + $0x10] sm:$0xff pattern:$0x75316420]
      %v468 = vld.sshfl [vmem:[#allocation1 + $0x18] sm:$0xff pattern:$0x75316420]
      %469 = vrot.lane.b32.xlu0 %v465, 58
      %v470 = vpop.permute.xlu0 %469
      %471 = vrot.lane.b32.xlu0 %v466, 58
      %v472 = vpop.permute.xlu0 %471
      %473 = vrot.lane.b32.xlu0 %v467, 58
      %v474 = vpop.permute.xlu0 %473
      %475 = vrot.lane.b32.xlu0 %v468, 58
      %v476 = vpop.permute.xlu0 %475
      %vm477 = vcmask 474112
      %v478 = vsel %vm477, %v470, %v472
      %v479 = vsel %vm477, %v472, %v474
      %v480 = vsel %vm477, %v474, %v476
      %485 = vst [vmem:[#allocation3 + $0x40] sm:$0xf] %v478
      %486 = vst [vmem:[#allocation3 + $0x48] sm:$0xf] %v479
      %487 = vst [vmem:[#allocation3 + $0x50] sm:$0xf] %v480
      %488 = vst.msk [vmem:[#allocation3 + $0x58] sm:$0xf] %vm360, %v476
      %v489 = vld [vmem:[#allocation2] sm:$0xff]
      %v490 = vld [vmem:[#allocation2 + $0x8] sm:$0xff]
      %s493 = scalar_lea.vmem [#allocation1], 1
      %494 = vst [vmem:[%s493] ss:$2 sm:$0xff] %v489
      %s495 = scalar_lea.vmem [#allocation1], 17
      %496 = vst [vmem:[%s495] ss:$2 sm:$0xff] %v490
      %v497 = vld.sshfl [vmem:[#allocation1] sm:$0xff pattern:$0x75316420]
      %v498 = vld.sshfl [vmem:[#allocation1 + $0x8] sm:$0xff pattern:$0x75316420]
      %v499 = vld.sshfl [vmem:[#allocation1 + $0x10] sm:$0xff pattern:$0x75316420]
      %v500 = vld.sshfl [vmem:[#allocation1 + $0x18] sm:$0xff pattern:$0x75316420]
      %501 = vrot.lane.b32.xlu0 %v497, 57
      %v502 = vpop.permute.xlu0 %501
      %503 = vrot.lane.b32.xlu0 %v498, 57
      %v504 = vpop.permute.xlu0 %503
      %505 = vrot.lane.b32.xlu0 %v499, 57
      %v506 = vpop.permute.xlu0 %505
      %507 = vrot.lane.b32.xlu0 %v500, 57
      %v508 = vpop.permute.xlu0 %507
      %vm509 = vcmask 465920
      %v510 = vsel %vm509, %v502, %v504
      %v511 = vsel %vm509, %v504, %v506
      %v512 = vsel %vm509, %v506, %v508
      %517 = vst [vmem:[#allocation3 + $0x40] sm:$0xf0] %v510
      %518 = vst [vmem:[#allocation3 + $0x48] sm:$0xf0] %v511
      %519 = vst [vmem:[#allocation3 + $0x50] sm:$0xf0] %v512
      %520 = vst.msk [vmem:[#allocation3 + $0x58] sm:$0xf0] %vm393, %v508
      %v521 = vld [vmem:[#allocation2] sm:$0xff]
      %v522 = vld [vmem:[#allocation2 + $0x8] sm:$0xff]
      %525 = vst [vmem:[#allocation1] ss:$2 sm:$0xff] %v521
      %s526 = scalar_lea.vmem [#allocation1], 16
      %527 = vst [vmem:[%s526] ss:$2 sm:$0xff] %v522
      %v528 = vld.sshfl [vmem:[#allocation1] sm:$0xff pattern:$0x75316420]
      %v529 = vld.sshfl [vmem:[#allocation1 + $0x8] sm:$0xff pattern:$0x75316420]
      %v530 = vld.sshfl [vmem:[#allocation1 + $0x10] sm:$0xff pattern:$0x75316420]
      %v531 = vld.sshfl [vmem:[#allocation1 + $0x18] sm:$0xff pattern:$0x75316420]
      %532 = vrot.lane.b32.xlu0 %v528, 125
      %v533 = vpop.permute.xlu0 %532
      %534 = vrot.lane.b32.xlu0 %v529, 125
      %v535 = vpop.permute.xlu0 %534
      %536 = vrot.lane.b32.xlu0 %v530, 125
      %v537 = vpop.permute.xlu0 %536
      %538 = vrot.lane.b32.xlu0 %v531, 125
      %v539 = vpop.permute.xlu0 %538
      %vm540 = vcmask 1022976
      %v541 = vsel %vm540, %v533, %v535
      %v542 = vsel %vm540, %v535, %v537
      %v543 = vsel %vm540, %v537, %v539
      %548 = vst [vmem:[#allocation3 + $0x60] sm:$0xf] %v541
      %549 = vst [vmem:[#allocation3 + $0x68] sm:$0xf] %v542
      %550 = vst [vmem:[#allocation3 + $0x70] sm:$0xf] %v543
      %551 = vst.msk [vmem:[#allocation3 + $0x78] sm:$0xf] %vm360, %v539
      %v552 = vld [vmem:[#allocation2] sm:$0xff]
      %v553 = vld [vmem:[#allocation2 + $0x8] sm:$0xff]
      %s556 = scalar_lea.vmem [#allocation1], 1
      %557 = vst [vmem:[%s556] ss:$2 sm:$0xff] %v552
      %s558 = scalar_lea.vmem [#allocation1], 17
      %559 = vst [vmem:[%s558] ss:$2 sm:$0xff] %v553
      %v560 = vld.sshfl [vmem:[#allocation1] sm:$0xff pattern:$0x75316420]
      %v561 = vld.sshfl [vmem:[#allocation1 + $0x8] sm:$0xff pattern:$0x75316420]
      %v562 = vld.sshfl [vmem:[#allocation1 + $0x10] sm:$0xff pattern:$0x75316420]
      %v563 = vld.sshfl [vmem:[#allocation1 + $0x18] sm:$0xff pattern:$0x75316420]
      %564 = vrot.lane.b32.xlu0 %v560, 103
      %v565 = vpop.permute.xlu0 %564
      %566 = vrot.lane.b32.xlu0 %v561, 103
      %v567 = vpop.permute.xlu0 %566
      %568 = vrot.lane.b32.xlu0 %v562, 103
      %v569 = vpop.permute.xlu0 %568
      %570 = vrot.lane.b32.xlu0 %v563, 103
      %v571 = vpop.permute.xlu0 %570
      %vm572 = vcmask 842752
      %v573 = vsel %vm572, %v565, %v567
      %v574 = vsel %vm572, %v567, %v569
      %v575 = vsel %vm572, %v569, %v571
      %580 = vst [vmem:[#allocation3 + $0x60] sm:$0xf0] %v573
      %581 = vst [vmem:[#allocation3 + $0x68] sm:$0xf0] %v574
      %582 = vst [vmem:[#allocation3 + $0x70] sm:$0xf0] %v575
      %583 = vst.msk [vmem:[#allocation3 + $0x78] sm:$0xf0] %vm393, %v571
      %v584 = vld [vmem:[#allocation2] sm:$0xff]
      %v585 = vld [vmem:[#allocation2 + $0x8] sm:$0xff]
      %588 = vst [vmem:[#allocation1] ss:$2 sm:$0xff] %v584
      %s589 = scalar_lea.vmem [#allocation1], 16
      %590 = vst [vmem:[%s589] ss:$2 sm:$0xff] %v585
      %v591 = vld.sshfl [vmem:[#allocation1] sm:$0xff pattern:$0x75316420]
      %v592 = vld.sshfl [vmem:[#allocation1 + $0x8] sm:$0xff pattern:$0x75316420]
      %v593 = vld.sshfl [vmem:[#allocation1 + $0x10] sm:$0xff pattern:$0x75316420]
      %v594 = vld.sshfl [vmem:[#allocation1 + $0x18] sm:$0xff pattern:$0x75316420]
      %595 = vrot.lane.b32.xlu0 %v591, 81
      %v596 = vpop.permute.xlu0 %595
      %597 = vrot.lane.b32.xlu0 %v592, 81
      %v598 = vpop.permute.xlu0 %597
      %599 = vrot.lane.b32.xlu0 %v593, 81
      %v600 = vpop.permute.xlu0 %599
      %601 = vrot.lane.b32.xlu0 %v594, 81
      %v602 = vpop.permute.xlu0 %601
      %v603 = vsel %vm222, %v596, %v598
      %v604 = vsel %vm222, %v598, %v600
      %v605 = vsel %vm222, %v600, %v602
      %610 = vst [vmem:[#allocation3 + $0x80] sm:$0xf] %v603
      %611 = vst [vmem:[#allocation3 + $0x88] sm:$0xf] %v604
      %612 = vst [vmem:[#allocation3 + $0x90] sm:$0xf] %v605
      %613 = vst.msk [vmem:[#allocation3 + $0x98] sm:$0xf] %vm360, %v602
      %v614 = vld [vmem:[#allocation2] sm:$0xff]
      %v615 = vld [vmem:[#allocation2 + $0x8] sm:$0xff]
      %s618 = scalar_lea.vmem [#allocation1], 1
      %619 = vst [vmem:[%s618] ss:$2 sm:$0xff] %v614
      %s620 = scalar_lea.vmem [#allocation1], 17
      %621 = vst [vmem:[%s620] ss:$2 sm:$0xff] %v615
      %v622 = vld.sshfl [vmem:[#allocation1] sm:$0xff pattern:$0x75316420]
      %v623 = vld.sshfl [vmem:[#allocation1 + $0x8] sm:$0xff pattern:$0x75316420]
      %v624 = vld.sshfl [vmem:[#allocation1 + $0x10] sm:$0xff pattern:$0x75316420]
      %v625 = vld.sshfl [vmem:[#allocation1 + $0x18] sm:$0xff pattern:$0x75316420]
      %626 = vrot.lane.b32.xlu0 %v622, 60
      %v627 = vpop.permute.xlu0 %626
      %628 = vrot.lane.b32.xlu0 %v623, 60
      %v629 = vpop.permute.xlu0 %628
      %630 = vrot.lane.b32.xlu0 %v624, 60
      %v631 = vpop.permute.xlu0 %630
      %632 = vrot.lane.b32.xlu0 %v625, 60
      %v633 = vpop.permute.xlu0 %632
      %vm634 = vcmask 490496
      %v635 = vsel %vm634, %v627, %v629
      %v636 = vsel %vm634, %v629, %v631
      %v637 = vsel %vm634, %v631, %v633
      %642 = vst [vmem:[#allocation3 + $0x80] sm:$0xf0] %v635
      %643 = vst [vmem:[#allocation3 + $0x88] sm:$0xf0] %v636
      %644 = vst [vmem:[#allocation3 + $0x90] sm:$0xf0] %v637
      %645 = vst.msk [vmem:[#allocation3 + $0x98] sm:$0xf0] %vm393, %v633
      %v646 = vld [vmem:[#allocation2] sm:$0xff]
      %v647 = vld [vmem:[#allocation2 + $0x8] sm:$0xff]
      %650 = vst [vmem:[#allocation1] ss:$2 sm:$0xff] %v646
      %s651 = scalar_lea.vmem [#allocation1], 16
      %652 = vst [vmem:[%s651] ss:$2 sm:$0xff] %v647
      %v653 = vld.sshfl [vmem:[#allocation1] sm:$0xff pattern:$0x75316420]
      %v654 = vld.sshfl [vmem:[#allocation1 + $0x8] sm:$0xff pattern:$0x75316420]
      %v655 = vld.sshfl [vmem:[#allocation1 + $0x10] sm:$0xff pattern:$0x75316420]
      %v656 = vld.sshfl [vmem:[#allocation1 + $0x18] sm:$0xff pattern:$0x75316420]
      %657 = vrot.lane.b32.xlu0 %v653, 38
      %v658 = vpop.permute.xlu0 %657
      %659 = vrot.lane.b32.xlu0 %v654, 38
      %v660 = vpop.permute.xlu0 %659
      %661 = vrot.lane.b32.xlu0 %v655, 38
      %v662 = vpop.permute.xlu0 %661
      %663 = vrot.lane.b32.xlu0 %v656, 38
      %v664 = vpop.permute.xlu0 %663
      %vm665 = vcmask 310272
      %v666 = vsel %vm665, %v658, %v660
      %v667 = vsel %vm665, %v660, %v662
      %v668 = vsel %vm665, %v662, %v664
      %673 = vst [vmem:[#allocation3 + $0xa0] sm:$0xf] %v666
      %674 = vst [vmem:[#allocation3 + $0xa8] sm:$0xf] %v667
      %675 = vst [vmem:[#allocation3 + $0xb0] sm:$0xf] %v668
      %676 = vst.msk [vmem:[#allocation3 + $0xb8] sm:$0xf] %vm360, %v664
      %v677 = vld [vmem:[#allocation2] sm:$0xff]
      %v678 = vld [vmem:[#allocation2 + $0x8] sm:$0xff]
      %s681 = scalar_lea.vmem [#allocation1], 1
      %682 = vst [vmem:[%s681] ss:$2 sm:$0xff] %v677
      %s683 = scalar_lea.vmem [#allocation1], 17
      %684 = vst [vmem:[%s683] ss:$2 sm:$0xff] %v678
      %v685 = vld.sshfl [vmem:[#allocation1] sm:$0xff pattern:$0x75316420]
      %v686 = vld.sshfl [vmem:[#allocation1 + $0x8] sm:$0xff pattern:$0x75316420]
      %v687 = vld.sshfl [vmem:[#allocation1 + $0x10] sm:$0xff pattern:$0x75316420]
      %v688 = vld.sshfl [vmem:[#allocation1 + $0x18] sm:$0xff pattern:$0x75316420]
      %689 = vrot.lane.b32.xlu0 %v685, 16
      %v690 = vpop.permute.xlu0 %689
      %691 = vrot.lane.b32.xlu0 %v686, 16
      %v692 = vpop.permute.xlu0 %691
      %693 = vrot.lane.b32.xlu0 %v687, 16
      %v694 = vpop.permute.xlu0 %693
      %695 = vrot.lane.b32.xlu0 %v688, 16
      %v696 = vpop.permute.xlu0 %695
      %vm697 = vcmask 130048
      %v698 = vsel %vm697, %v690, %v692
      %v699 = vsel %vm697, %v692, %v694
      %v700 = vsel %vm697, %v694, %v696
      %705 = vst [vmem:[#allocation3 + $0xa0] sm:$0xf0] %v698
      %706 = vst [vmem:[#allocation3 + $0xa8] sm:$0xf0] %v699
      %707 = vst [vmem:[#allocation3 + $0xb0] sm:$0xf0] %v700
      %708 = vst.msk [vmem:[#allocation3 + $0xb8] sm:$0xf0] %vm393, %v696
      %v709 = vld [vmem:[%s1] sm:$0xff]
      %v710 = vld [vmem:[#allocation3] sm:$0xff]
      %v711 = vld [vmem:[#allocation3 + $0x8] sm:$0xff]
      %v712 = vld [vmem:[#allocation3 + $0x10] sm:$0xff]
      %v713 = vld [vmem:[#allocation3 + $0x18] sm:$0xff]
      %v714 = vld [vmem:[#allocation3 + $0x20] sm:$0xff]
      %v715 = vld [vmem:[#allocation3 + $0x28] sm:$0xff]
      %v716 = vld [vmem:[#allocation3 + $0x30] sm:$0xff]
      %v717 = vld [vmem:[#allocation3 + $0x38] sm:$0xff]
      %v718 = vld [vmem:[#allocation3 + $0x40] sm:$0xff]
      %v719 = vld [vmem:[#allocation3 + $0x48] sm:$0xff]
      %v720 = vld [vmem:[#allocation3 + $0x50] sm:$0xff]
      %v721 = vld [vmem:[#allocation3 + $0x58] sm:$0xff]
      %v722 = vld [vmem:[#allocation3 + $0x60] sm:$0xff]
      %v723 = vld [vmem:[#allocation3 + $0x68] sm:$0xff]
      %v724 = vld [vmem:[#allocation3 + $0x70] sm:$0xff]
      %v725 = vld [vmem:[#allocation3 + $0x78] sm:$0xff]
      %v726 = vld [vmem:[#allocation3 + $0x80] sm:$0xff]
      %v727 = vld [vmem:[#allocation3 + $0x88] sm:$0xff]
      %v728 = vld [vmem:[#allocation3 + $0x90] sm:$0xff]
      %v729 = vld [vmem:[#allocation3 + $0x98] sm:$0xff]
      %v730 = vld [vmem:[#allocation3 + $0xa0] sm:$0xff]
      %v731 = vld [vmem:[#allocation3 + $0xa8] sm:$0xff]
      %v732 = vld [vmem:[#allocation3 + $0xb0] sm:$0xff]
      %v733 = vld [vmem:[#allocation3 + $0xb8] sm:$0xff]
      %vm734 = vcmask 392192
      %v736 = vsel %vm734, %v709, 0
      %738 = vmatpush.msra.mxu0 0.0
      %739 = vmatpush.msra.mxu0 0.0
      %740 = vmatpush.msra.mxu0 0.0
      %741 = vmatpush.msra.mxu0 0.0
      %742 = vmatpush.msra.mxu0 0.0
      %743 = vmatpush.msra.mxu0 0.0
      %744 = vmatpush.msra.mxu0 0.0
      %745 = vmatpush.msra.mxu0 0.0
      %746 = vmatpush.msra.mxu0 0.0
      %747 = vmatpush.msra.mxu0 0.0
      %748 = vmatpush.msra.mxu0 %v730
      %749 = vmatpush.msra.mxu0 %v726
      %750 = vmatpush.msra.mxu0 %v722
      %751 = vmatpush.msra.mxu0 %v718
      %752 = vmatpush.msra.mxu0 %v714
      %753 = vmatpush.msra.mxu0 %v710
      %754 = vmatmul.f32.gmra.mxu0 %v736
      %v755 = vpop.f32.mrf.mxu0
      %v756 = vadd.f32 0.0, %v755
      %757 = vdwg.mxu0
      %758 = vmatpush.msra.mxu0 0.0
      %759 = vmatpush.msra.mxu0 0.0
      %760 = vmatpush.msra.mxu0 0.0
      %761 = vmatpush.msra.mxu0 0.0
      %762 = vmatpush.msra.mxu0 0.0
      %763 = vmatpush.msra.mxu0 0.0
      %764 = vmatpush.msra.mxu0 0.0
      %765 = vmatpush.msra.mxu0 0.0
      %766 = vmatpush.msra.mxu0 0.0
      %767 = vmatpush.msra.mxu0 0.0
      %768 = vmatpush.msra.mxu0 %v731
      %769 = vmatpush.msra.mxu0 %v727
      %770 = vmatpush.msra.mxu0 %v723
      %771 = vmatpush.msra.mxu0 %v719
      %772 = vmatpush.msra.mxu0 %v715
      %773 = vmatpush.msra.mxu0 %v711
      %774 = vmatmul.f32.gmra.mxu0 %v736
      %v775 = vpop.f32.mrf.mxu0
      %v776 = vadd.f32 0.0, %v775
      %777 = vdwg.mxu0
      %778 = vmatpush.msra.mxu0 0.0
      %779 = vmatpush.msra.mxu0 0.0
      %780 = vmatpush.msra.mxu0 0.0
      %781 = vmatpush.msra.mxu0 0.0
      %782 = vmatpush.msra.mxu0 0.0
      %783 = vmatpush.msra.mxu0 0.0
      %784 = vmatpush.msra.mxu0 0.0
      %785 = vmatpush.msra.mxu0 0.0
      %786 = vmatpush.msra.mxu0 0.0
      %787 = vmatpush.msra.mxu0 0.0
      %788 = vmatpush.msra.mxu0 %v732
      %789 = vmatpush.msra.mxu0 %v728
      %790 = vmatpush.msra.mxu0 %v724
      %791 = vmatpush.msra.mxu0 %v720
      %792 = vmatpush.msra.mxu0 %v716
      %793 = vmatpush.msra.mxu0 %v712
      %794 = vmatmul.f32.gmra.mxu0 %v736
      %v795 = vpop.f32.mrf.mxu0
      %v796 = vadd.f32 0.0, %v795
      %797 = vdwg.mxu0
      %798 = vmatpush.msra.mxu0 0.0
      %799 = vmatpush.msra.mxu0 0.0
      %800 = vmatpush.msra.mxu0 0.0
      %801 = vmatpush.msra.mxu0 0.0
      %802 = vmatpush.msra.mxu0 0.0
      %803 = vmatpush.msra.mxu0 0.0
      %804 = vmatpush.msra.mxu0 0.0
      %805 = vmatpush.msra.mxu0 0.0
      %806 = vmatpush.msra.mxu0 0.0
      %807 = vmatpush.msra.mxu0 0.0
      %808 = vmatpush.msra.mxu0 %v733
      %809 = vmatpush.msra.mxu0 %v729
      %810 = vmatpush.msra.mxu0 %v725
      %811 = vmatpush.msra.mxu0 %v721
      %812 = vmatpush.msra.mxu0 %v717
      %813 = vmatpush.msra.mxu0 %v713
      %814 = vmatmul.f32.gmra.mxu0 %v736
      %v815 = vpop.f32.mrf.mxu0
      %v816 = vadd.f32 0.0, %v815
      %817 = vdwg.mxu0
      %819 = vset.pattern.permute.xlu0 0
      %820 = vperm.xlu0 %819, %v198
      %v821 = vpop.permute.xlu0 %820
      %v823 = vmul.f32 %v756, %v821
      %v824 = vmul.f32 %v776, %v821
      %v825 = vmul.f32 %v796, %v821
      %v826 = vmul.f32 %v816, %v821
      %827 = vset.pattern.permute.xlu0 1
      %828 = vperm.xlu0 %827, %v198
      %v829 = vpop.permute.xlu0 %828
      %v831 = vadd.f32 %v823, %v829
      %v832 = vadd.f32 %v824, %v829
      %v833 = vadd.f32 %v825, %v829
      %v834 = vadd.f32 %v826, %v829
      %v835 = vxor.u32 %v831, 2147483648
      %v836 = vxor.u32 %v832, 2147483648
      %v837 = vxor.u32 %v833, 2147483648
      %v838 = vxor.u32 %v834, 2147483648
      %v839 = vmul.f32 %v835, 1.442695
      %v840 = vpow.pop %v839
      %v841 = vmul.f32 %v836, 1.442695
      %v842 = vpow.pop %v841
      %v843 = vmul.f32 %v837, 1.442695
      %v844 = vpow.pop %v843
      %v845 = vmul.f32 %v838, 1.442695
      %v846 = vpow.pop %v845
      %v847 = vadd.f32 %v840, 1.0
      %v848 = vadd.f32 %v842, 1.0
      %v849 = vadd.f32 %v844, 1.0
      %v850 = vadd.f32 %v846, 1.0
      %v851 = vrcp.pop %v847
      %v852 = vmul.f32 %v847, %v851
      %v853 = vsub.f32 1.0, %v852
      %v854 = vmul.f32 %v851, %v853
      %v855 = vadd.f32 %v851, %v854
      %vm856 = vweird.f32 %v847
      %vm857 = vweird.f32 %v851
      %vm858 = vmor %vm856, %vm857
      %v859 = vsel %vm858, %v851, %v855
      %v860 = vand.u32 2147483647, %v847
      %vm861 = vcmp.eq.f32.partialorder %v860, 8.507059e+37
      %v862 = vand.u32 %v847, 2147483648
      %v863 = vor.u32 1.1754944e-38, %v862
      %v864 = vsel %vm861, %v863, %v859
      %v865 = vmul.f32 1.0, %v864
      %v866 = vrcp.pop %v848
      %v867 = vmul.f32 %v848, %v866
      %v868 = vsub.f32 1.0, %v867
      %v869 = vmul.f32 %v866, %v868
      %v870 = vadd.f32 %v866, %v869
      %vm871 = vweird.f32 %v848
      %vm872 = vweird.f32 %v866
      %vm873 = vmor %vm871, %vm872
      %v874 = vsel %vm873, %v866, %v870
      %v875 = vand.u32 2147483647, %v848
      %vm876 = vcmp.eq.f32.partialorder %v875, 8.507059e+37
      %v877 = vand.u32 %v848, 2147483648
      %v878 = vor.u32 1.1754944e-38, %v877
      %v879 = vsel %vm876, %v878, %v874
      %v880 = vmul.f32 1.0, %v879
      %v881 = vrcp.pop %v849
      %v882 = vmul.f32 %v849, %v881
      %v883 = vsub.f32 1.0, %v882
      %v884 = vmul.f32 %v881, %v883
      %v885 = vadd.f32 %v881, %v884
      %vm886 = vweird.f32 %v849
      %vm887 = vweird.f32 %v881
      %vm888 = vmor %vm886, %vm887
      %v889 = vsel %vm888, %v881, %v885
      %v890 = vand.u32 2147483647, %v849
      %vm891 = vcmp.eq.f32.partialorder %v890, 8.507059e+37
      %v892 = vand.u32 %v849, 2147483648
      %v893 = vor.u32 1.1754944e-38, %v892
      %v894 = vsel %vm891, %v893, %v889
      %v895 = vmul.f32 1.0, %v894
      %v896 = vrcp.pop %v850
      %v897 = vmul.f32 %v850, %v896
      %v898 = vsub.f32 1.0, %v897
      %v899 = vmul.f32 %v896, %v898
      %v900 = vadd.f32 %v896, %v899
      %vm901 = vweird.f32 %v850
      %vm902 = vweird.f32 %v896
      %vm903 = vmor %vm901, %vm902
      %v904 = vsel %vm903, %v896, %v900
      %v905 = vand.u32 2147483647, %v850
      %vm906 = vcmp.eq.f32.partialorder %v905, 8.507059e+37
      %v907 = vand.u32 %v850, 2147483648
      %v908 = vor.u32 1.1754944e-38, %v907
      %v909 = vsel %vm906, %v908, %v904
      %v910 = vmul.f32 1.0, %v909
      %v911 = vmul.f32 %v831, %v865
      %v912 = vmul.f32 %v832, %v880
      %v913 = vmul.f32 %v833, %v895
      %v914 = vmul.f32 %v834, %v910
      %915 = vst [vmem:[#allocation4] sm:$0xff] %v911
      %916 = vst [vmem:[#allocation4 + $0x8] sm:$0xff] %v912
      %917 = vst [vmem:[#allocation4 + $0x10] sm:$0xff] %v913
      %vm918 = vcmask 97280
      %919 = vst.msk [vmem:[#allocation4 + $0x18] sm:$0xff] %vm918, %v914
      %v920 = vld [vmem:[#allocation4] sm:$0xff]
      %v921 = vld [vmem:[#allocation4 + $0x8] sm:$0xff]
      %v922 = vld [vmem:[#allocation4 + $0x10] sm:$0xff]
      %923 = vst [vmem:[#allocation5] sm:$0xff] %v920
      %924 = vst [vmem:[#allocation5 + $0x8] sm:$0xff] %v921
      %vm925 = vcmask 785408
      %926 = vst.msk [vmem:[#allocation5 + $0x10] sm:$0xff] %vm925, %v922
      %v927 = vld [vmem:[#allocation4] sm:$0xff]
      %v928 = vld [vmem:[#allocation4 + $0x8] sm:$0xff]
      %v929 = vld [vmem:[#allocation4 + $0x10] sm:$0xff]
      %933 = vrot.lane.b32.xlu0 %v927, 127
      %v934 = vpop.permute.xlu0 %933
      %935 = vrot.lane.b32.xlu0 %v928, 127
      %v936 = vpop.permute.xlu0 %935
      %937 = vrot.lane.b32.xlu0 %v929, 127
      %v938 = vpop.permute.xlu0 %937
      %vm939 = vcmask 1039360
      %v940 = vsel %vm939, %v934, %v936
      %v941 = vsel %vm939, %v936, %v938
      %945 = vst [vmem:[#allocation5 + $0x18] sm:$0xff] %v940
      %946 = vst [vmem:[#allocation5 + $0x20] sm:$0xff] %v941
      %947 = vst.msk [vmem:[#allocation5 + $0x28] sm:$0xff] %vm925, %v938
      %v948 = vld [vmem:[#allocation4] sm:$0xff]
      %v949 = vld [vmem:[#allocation4 + $0x8] sm:$0xff]
      %v950 = vld [vmem:[#allocation4 + $0x10] sm:$0xff]
      %954 = vrot.lane.b32.xlu0 %v948, 106
      %v955 = vpop.permute.xlu0 %954
      %956 = vrot.lane.b32.xlu0 %v949, 106
      %v957 = vpop.permute.xlu0 %956
      %958 = vrot.lane.b32.xlu0 %v950, 106
      %v959 = vpop.permute.xlu0 %958
      %vm960 = vcmask 867328
      %v961 = vsel %vm960, %v955, %v957
      %v962 = vsel %vm960, %v957, %v959
      %966 = vst [vmem:[#allocation5 + $0x30] sm:$0xff] %v961
      %967 = vst [vmem:[#allocation5 + $0x38] sm:$0xff] %v962
      %968 = vst.msk [vmem:[#allocation5 + $0x40] sm:$0xff] %vm925, %v959
      %v969 = vld [vmem:[#allocation4] sm:$0xff]
      %v970 = vld [vmem:[#allocation4 + $0x8] sm:$0xff]
      %v971 = vld [vmem:[#allocation4 + $0x10] sm:$0xff]
      %975 = vrot.lane.b32.xlu0 %v969, 105
      %v976 = vpop.permute.xlu0 %975
      %977 = vrot.lane.b32.xlu0 %v970, 105
      %v978 = vpop.permute.xlu0 %977
      %979 = vrot.lane.b32.xlu0 %v971, 105
      %v980 = vpop.permute.xlu0 %979
      %vm981 = vcmask 859136
      %v982 = vsel %vm981, %v976, %v978
      %v983 = vsel %vm981, %v978, %v980
      %987 = vst [vmem:[#allocation5 + $0x48] sm:$0xff] %v982
      %988 = vst [vmem:[#allocation5 + $0x50] sm:$0xff] %v983
      %989 = vst.msk [vmem:[#allocation5 + $0x58] sm:$0xff] %vm925, %v980
      %v990 = vld [vmem:[%s2] sm:$0xff]
      %v991 = vld [vmem:[#allocation5] sm:$0xff]
      %v992 = vld [vmem:[#allocation5 + $0x8] sm:$0xff]
      %v993 = vld [vmem:[#allocation5 + $0x10] sm:$0xff]
      %v994 = vld [vmem:[#allocation5 + $0x18] sm:$0xff]
      %v995 = vld [vmem:[#allocation5 + $0x20] sm:$0xff]
      %v996 = vld [vmem:[#allocation5 + $0x28] sm:$0xff]
      %v997 = vld [vmem:[#allocation5 + $0x30] sm:$0xff]
      %v998 = vld [vmem:[#allocation5 + $0x38] sm:$0xff]
      %v999 = vld [vmem:[#allocation5 + $0x40] sm:$0xff]
      %v1000 = vld [vmem:[#allocation5 + $0x48] sm:$0xff]
      %v1001 = vld [vmem:[#allocation5 + $0x50] sm:$0xff]
      %v1002 = vld [vmem:[#allocation5 + $0x58] sm:$0xff]
      %vm1003 = vcmask 261120
      %v1005 = vsel %vm1003, %v990, 0
      %1007 = vmatpush.msra.mxu0 0.0
      %1008 = vmatpush.msra.mxu0 0.0
      %1009 = vmatpush.msra.mxu0 0.0
      %1010 = vmatpush.msra.mxu0 0.0
      %1011 = vmatpush.msra.mxu0 0.0
      %1012 = vmatpush.msra.mxu0 0.0
      %1013 = vmatpush.msra.mxu0 0.0
      %1014 = vmatpush.msra.mxu0 0.0
      %1015 = vmatpush.msra.mxu0 0.0
      %1016 = vmatpush.msra.mxu0 0.0
      %1017 = vmatpush.msra.mxu0 0.0
      %1018 = vmatpush.msra.mxu0 0.0
      %1019 = vmatpush.msra.mxu0 %v1000
      %1020 = vmatpush.msra.mxu0 %v997
      %1021 = vmatpush.msra.mxu0 %v994
      %1022 = vmatpush.msra.mxu0 %v991
      %1023 = vmatmul.f32.gmra.mxu0 %v1005
      %v1024 = vpop.f32.mrf.mxu0
      %v1025 = vadd.f32 0.0, %v1024
      %1026 = vdwg.mxu0
      %1027 = vmatpush.msra.mxu0 0.0
      %1028 = vmatpush.msra.mxu0 0.0
      %1029 = vmatpush.msra.mxu0 0.0
      %1030 = vmatpush.msra.mxu0 0.0
      %1031 = vmatpush.msra.mxu0 0.0
      %1032 = vmatpush.msra.mxu0 0.0
      %1033 = vmatpush.msra.mxu0 0.0
      %1034 = vmatpush.msra.mxu0 0.0
      %1035 = vmatpush.msra.mxu0 0.0
      %1036 = vmatpush.msra.mxu0 0.0
      %1037 = vmatpush.msra.mxu0 0.0
      %1038 = vmatpush.msra.mxu0 0.0
      %1039 = vmatpush.msra.mxu0 %v1001
      %1040 = vmatpush.msra.mxu0 %v998
      %1041 = vmatpush.msra.mxu0 %v995
      %1042 = vmatpush.msra.mxu0 %v992
      %1043 = vmatmul.f32.gmra.mxu0 %v1005
      %v1044 = vpop.f32.mrf.mxu0
      %v1045 = vadd.f32 0.0, %v1044
      %1046 = vdwg.mxu0
      %1047 = vmatpush.msra.mxu0 0.0
      %1048 = vmatpush.msra.mxu0 0.0
      %1049 = vmatpush.msra.mxu0 0.0
      %1050 = vmatpush.msra.mxu0 0.0
      %1051 = vmatpush.msra.mxu0 0.0
      %1052 = vmatpush.msra.mxu0 0.0
      %1053 = vmatpush.msra.mxu0 0.0
      %1054 = vmatpush.msra.mxu0 0.0
      %1055 = vmatpush.msra.mxu0 0.0
      %1056 = vmatpush.msra.mxu0 0.0
      %1057 = vmatpush.msra.mxu0 0.0
      %1058 = vmatpush.msra.mxu0 0.0
      %1059 = vmatpush.msra.mxu0 %v1002
      %1060 = vmatpush.msra.mxu0 %v999
      %1061 = vmatpush.msra.mxu0 %v996
      %1062 = vmatpush.msra.mxu0 %v993
      %1063 = vmatmul.f32.gmra.mxu0 %v1005
      %v1064 = vpop.f32.mrf.mxu0
      %v1065 = vadd.f32 0.0, %v1064
      %1066 = vdwg.mxu0
      %1067 = vset.pattern.permute.xlu0 2
      %1068 = vperm.xlu0 %1067, %v198
      %v1069 = vpop.permute.xlu0 %1068
      %v1071 = vmul.f32 %v1025, %v1069
      %v1072 = vmul.f32 %v1045, %v1069
      %v1073 = vmul.f32 %v1065, %v1069
      %1074 = vset.pattern.permute.xlu0 3
      %1075 = vperm.xlu0 %1074, %v198
      %v1076 = vpop.permute.xlu0 %1075
      %v1078 = vadd.f32 %v1071, %v1076
      %v1079 = vadd.f32 %v1072, %v1076
      %v1080 = vadd.f32 %v1073, %v1076
      %v1081 = vxor.u32 %v1078, 2147483648
      %v1082 = vxor.u32 %v1079, 2147483648
      %v1083 = vxor.u32 %v1080, 2147483648
      %v1084 = vmul.f32 %v1081, 1.442695
      %v1085 = vpow.pop %v1084
      %v1086 = vmul.f32 %v1082, 1.442695
      %v1087 = vpow.pop %v1086
      %v1088 = vmul.f32 %v1083, 1.442695
      %v1089 = vpow.pop %v1088
      %v1090 = vadd.f32 %v1085, 1.0
      %v1091 = vadd.f32 %v1087, 1.0
      %v1092 = vadd.f32 %v1089, 1.0
      %v1093 = vrcp.pop %v1090
      %v1094 = vmul.f32 %v1090, %v1093
      %v1095 = vsub.f32 1.0, %v1094
      %v1096 = vmul.f32 %v1093, %v1095
      %v1097 = vadd.f32 %v1093, %v1096
      %vm1098 = vweird.f32 %v1090
      %vm1099 = vweird.f32 %v1093
      %vm1100 = vmor %vm1098, %vm1099
      %v1101 = vsel %vm1100, %v1093, %v1097
      %v1102 = vand.u32 2147483647, %v1090
      %vm1103 = vcmp.eq.f32.partialorder %v1102, 8.507059e+37
      %v1104 = vand.u32 %v1090, 2147483648
      %v1105 = vor.u32 1.1754944e-38, %v1104
      %v1106 = vsel %vm1103, %v1105, %v1101
      %v1107 = vmul.f32 1.0, %v1106
      %v1108 = vrcp.pop %v1091
      %v1109 = vmul.f32 %v1091, %v1108
      %v1110 = vsub.f32 1.0, %v1109
      %v1111 = vmul.f32 %v1108, %v1110
      %v1112 = vadd.f32 %v1108, %v1111
      %vm1113 = vweird.f32 %v1091
      %vm1114 = vweird.f32 %v1108
      %vm1115 = vmor %vm1113, %vm1114
      %v1116 = vsel %vm1115, %v1108, %v1112
      %v1117 = vand.u32 2147483647, %v1091
      %vm1118 = vcmp.eq.f32.partialorder %v1117, 8.507059e+37
      %v1119 = vand.u32 %v1091, 2147483648
      %v1120 = vor.u32 1.1754944e-38, %v1119
      %v1121 = vsel %vm1118, %v1120, %v1116
      %v1122 = vmul.f32 1.0, %v1121
      %v1123 = vrcp.pop %v1092
      %v1124 = vmul.f32 %v1092, %v1123
      %v1125 = vsub.f32 1.0, %v1124
      %v1126 = vmul.f32 %v1123, %v1125
      %v1127 = vadd.f32 %v1123, %v1126
      %vm1128 = vweird.f32 %v1092
      %vm1129 = vweird.f32 %v1123
      %vm1130 = vmor %vm1128, %vm1129
      %v1131 = vsel %vm1130, %v1123, %v1127
      %v1132 = vand.u32 2147483647, %v1092
      %vm1133 = vcmp.eq.f32.partialorder %v1132, 8.507059e+37
      %v1134 = vand.u32 %v1092, 2147483648
      %v1135 = vor.u32 1.1754944e-38, %v1134
      %v1136 = vsel %vm1133, %v1135, %v1131
      %v1137 = vmul.f32 1.0, %v1136
      %v1138 = vmul.f32 %v1078, %v1107
      %v1139 = vmul.f32 %v1079, %v1122
      %v1140 = vmul.f32 %v1080, %v1137
      %1141 = vst.msk [vmem:[%s197] sm:$0xff] %vm697, %v1138
      %1143 = vrot.lane.b32.xlu0 %v1138, 122
      %v1144 = vpop.permute.xlu0 %1143
      %vm1146 = vcmask 261248
      %1147 = vst.msk [vmem:[%s197] sm:$0xff] %vm1146, %v1144
      %1148 = vrot.lane.b32.xlu0 %v1138, 116
      %v1149 = vpop.permute.xlu0 %1148
      %vm1151 = vcmask 392448
      %1152 = vst.msk [vmem:[%s197] sm:$0xff] %vm1151, %v1149
      %1153 = vrot.lane.b32.xlu0 %v1138, 110
      %v1154 = vpop.permute.xlu0 %1153
      %vm1156 = vcmask 523648
      %1157 = vst.msk [vmem:[%s197] sm:$0xff] %vm1156, %v1154
      %1158 = vrot.lane.b32.xlu0 %v1138, 104
      %v1159 = vpop.permute.xlu0 %1158
      %vm1161 = vcmask 654848
      %1162 = vst.msk [vmem:[%s197] sm:$0xff] %vm1161, %v1159
      %1163 = vrot.lane.b32.xlu0 %v1138, 98
      %v1164 = vpop.permute.xlu0 %1163
      %vm1166 = vcmask 786048
      %1167 = vst.msk [vmem:[%s197] sm:$0xff] %vm1166, %v1164
      %1169 = vrot.lane.b32.xlu0 %v1139, 92
      %v1170 = vpop.permute.xlu0 %1169
      %vm1172 = vcmask 917248
      %1173 = vst.msk [vmem:[%s197] sm:$0xff] %vm1172, %v1170
      %1174 = vrot.lane.b32.xlu0 %v1139, 86
      %v1175 = vpop.permute.xlu0 %1174
      %vm1177 = vcmask 1048448
      %1178 = vst.msk [vmem:[%s197] sm:$0xff] %vm1177, %v1175
      %1179 = vrot.lane.b32.xlu0 %v1139, 80
      %v1180 = vpop.permute.xlu0 %1179
      %1182 = vst.msk [vmem:[%s197 + $0x8] sm:$0xff] %vm697, %v1180
      %1183 = vrot.lane.b32.xlu0 %v1139, 74
      %v1184 = vpop.permute.xlu0 %1183
      %1186 = vst.msk [vmem:[%s197 + $0x8] sm:$0xff] %vm1146, %v1184
      %1187 = vrot.lane.b32.xlu0 %v1139, 68
      %v1188 = vpop.permute.xlu0 %1187
      %1190 = vst.msk [vmem:[%s197 + $0x8] sm:$0xff] %vm1151, %v1188
      %1192 = vrot.lane.b32.xlu0 %v1139, 62
      %v1193 = vpop.permute.xlu0 %1192
      %1194 = vrot.lane.b32.xlu0 %v1140, 62
      %v1195 = vpop.permute.xlu0 %1194
      %vm1196 = vcmask 506880
      %v1197 = vsel %vm1196, %v1193, %v1195
      %1199 = vst.msk [vmem:[%s197 + $0x8] sm:$0xff] %vm1156, %v1197
      %1200 = vrot.lane.b32.xlu0 %v1140, 56
      %v1201 = vpop.permute.xlu0 %1200
      %1203 = vst.msk [vmem:[%s197 + $0x8] sm:$0xff] %vm1161, %v1201
      %1204 = vrot.lane.b32.xlu0 %v1140, 50
      %v1205 = vpop.permute.xlu0 %1204
      %1207 = vst.msk [vmem:[%s197 + $0x8] sm:$0xff] %vm1166, %v1205
      %1208 = vrot.lane.b32.xlu0 %v1140, 44
      %v1209 = vpop.permute.xlu0 %1208
      %1211 = vst.msk [vmem:[%s197 + $0x8] sm:$0xff] %vm1172, %v1209
      %1212 = vrot.lane.b32.xlu0 %v1140, 38
      %v1213 = vpop.permute.xlu0 %1212
      %1215 = vst.msk [vmem:[%s197 + $0x8] sm:$0xff] %vm1177, %v1213
      %p1216 = scmp.lt.s32.totalorder %s15, 1
      %s1217 = scalar_select %p1216, %s15, 1
      %s1218 = smul.addr %s1217, 2
      %s1219 = smul.addr %s1218, 8
      %s1220 = scalar_lea.vmem %s4, %s1219
      // Predicated region
      $region37: #{pconv_forward.1} parent=35 // pred_check
        %p1221 = pneg %p122
      $region38: #{pconv_forward.1} parent=35 // pred_check_branch
        %1223 = sbr.rel (%p1221) target = $region40
      $region39: #{pconv_forward.1} parent=35 // pred_region
        _
      $region40: #{pconv_forward.1} parent=35 // pred_fallthru
        _
    $region36: #{pconv_forward.1} parent=5 // pred_fallthru
      _
    %p1224 = scmp.le.s32.totalorder 2, %s10
    // Predicated region
    $region41: #{pconv_forward.1} parent=5 // pred_check
      %p1225 = pneg %p1224
    $region42: #{pconv_forward.1} parent=5 // pred_check_branch
      %1227 = sbr.rel (%p1225) target = $region44
    $region43: #{pconv_forward.1} parent=5 // pred_region
      %s1228 = ssub.s32 %s10, 2
      // Predicated region
      $region45: #{pconv_forward.1} parent=43 // pred_check
        %p1229 = pneg %p128
      $region46: #{pconv_forward.1} parent=43 // pred_check_branch
        %1231 = sbr.rel (%p1229) target = $region48
      $region47: #{pconv_forward.1} parent=43 // pred_region
        %p1232 = scmp.lt.s32.totalorder %s16, 1
        %s1233 = scalar_select %p1232, %s16, 1
        %s1234 = smul.addr %s1233, 2
        %s1235 = smul.addr %s1234, 8
        %s1236 = scalar_lea.vmem %s4, %s1235
      $region48: #{pconv_forward.1} parent=43 // pred_fallthru
        _
    $region44: #{pconv_forward.1} parent=5 // pred_fallthru
      _
  $region6: #{pconv_forward.1} parent=0 // loop_footer
    %s14 = sadd.s32 1, %s10
  $region7: #{pconv_forward.1} parent=0 // loop_footer_branch
    %9 = sbr.rel target = $region3
  $region8: #{pconv_forward.1} parent=0 // loop_exit
    _

</llo_original>
